<compile_context>
chip_gen: v6e
topology: v6e:2x2x1
jax: 0.10.0
libtpu: 0.0.40
codegen_flags: <defaults>
</compile_context>

<pallas_src>
import functools
import math

import jax
import jax.numpy as jnp
from jax.experimental import pallas as pl
from jax.experimental.pallas import tpu as pltpu

HIDDEN = 768
_MIB = 1024 * 1024


def _round_up(x, m):
    return (x + m - 1) // m * m


def _head_kernel(x_ref, wp_ref, bp_ref, wc_ref, bc_ref, out_ref, *, compute_dtype):
    # x_ref : [tm, 768]  CLS hidden-state tile (pipelined over the batch)
    # wp_ref: [768, 768] pooler weight, pre-transposed to [in, out] (resident)
    # bp_ref: [1, 768]   pooler bias (resident, f32)
    # wc_ref: [1, 768]   classifier weight row, natural PyTorch layout (f32)
    # bc_ref: [1]        classifier bias, SMEM scalar
    # out_ref:[tm, 1]
    x = x_ref[...].astype(compute_dtype)  # no-op when activations arrive in bf16
    pre = jnp.dot(x, wp_ref[...], preferred_element_type=jnp.float32) + bp_ref[...]
    pooled = jnp.tanh(pre)  # f32 tanh on the EUP (also correct for v5e)
    # input_dropout is identity at inference time (eval mode).
    # TODO(synk): training-mode dropout would need pltpu.prng_seed/prng_random_bits.
    # Classifier (768 -> 1) as a VPU multiply + lane reduction instead of a
    # width-1 MXU matmul (keeps the MXU free for the pooler).
    logits = jnp.sum(pooled * wc_ref[...], axis=-1, keepdims=True) + bc_ref[0]
    out_ref[...] = logits.astype(out_ref.dtype)


def prepare_head_params(pooler_w, pooler_b, clf_w, clf_b, matmul_dtype=jnp.bfloat16):
    """One-time parameter prep (do at load time, NOT per forward call)."""
    return dict(
        wp=jnp.asarray(pooler_w).T.astype(matmul_dtype),            # [768 in, 768 out]
        bp=jnp.asarray(pooler_b).reshape(1, HIDDEN).astype(jnp.float32),
        wc=jnp.asarray(clf_w).reshape(1, HIDDEN).astype(jnp.float32),
        bc=jnp.asarray(clf_b).reshape(1).astype(jnp.float32),
    )


def _vmem_bytes(tm, x_itemsize, w_itemsize):
    """Steady-state VMEM footprint (double-buffered pipeline) in bytes."""
    x_buf = 2 * tm * HIDDEN * x_itemsize          # activation tile, 2 buffers
    w_buf = 2 * HIDDEN * HIDDEN * w_itemsize      # pooler weight (resident, 2 bufs)
    vec = 2 * 2 * HIDDEN * 4                      # bp + wc (f32, 2 bufs each)
    out_buf = 2 * tm * 128 * 4                    # (tm,1) block lane-pads to 128
    return x_buf + w_buf + vec + out_buf


def bert_head_forward(cls_hidden, params, *, block_m=1024):
    """cls_hidden: [B, 768] (ideally bf16 straight from the encoder) -> logits: [B]"""
    B, H = cls_hidden.shape
    assert H == HIDDEN

    wp, bp, wc, bc = params["wp"], params["bp"], params["wc"], params["bc"]
    compute_dtype = wp.dtype

    # Batch tiling: big tiles (overhead-amortised), but capped at ceil(B/2) so the
    # grid has >= 2 independent steps (keeps both v7x TensorCores busy).
    tm = max(8, min(_round_up(block_m, 8), _round_up(pl.cdiv(B, 2), 8)))
    # Clamp the tile so the double-buffered footprint fits every generation's VMEM
    # (v7x: 64 MiB physical; v5e: raise the 16 MiB scoped default below).
    while tm > 8 and _vmem_bytes(tm, cls_hidden.dtype.itemsize, wp.dtype.itemsize) > 40 * _MIB:
        tm = max(8, _round_up(tm // 2, 8))

    grid = (pl.cdiv(B, tm),)  # partial last tile; padded rows are never stored

    vmem_need = _vmem_bytes(tm, cls_hidden.dtype.itemsize, wp.dtype.itemsize)
    vmem_limit = int(min(max(vmem_need + 8 * _MIB, 32 * _MIB), 56 * _MIB))

    kernel = functools.partial(_head_kernel, compute_dtype=compute_dtype)

    cost = pl.CostEstimate(
        flops=2 * B * H * H + 4 * B * H,
        transcendentals=B * H,
        bytes_accessed=(
            B * H * cls_hidden.dtype.itemsize   # activations
            + H * H * wp.dtype.itemsize         # pooler weight (resident)
            + 3 * H * 4                         # biases / classifier row
            + B * 4                             # logits
        ),
    )

    out = pl.pallas_call(
        kernel,
        out_shape=jax.ShapeDtypeStruct((B, 1), jnp.float32),
        grid=grid,
        in_specs=[
            pl.BlockSpec((tm, H), lambda i: (i, 0)),   # x: batch-tiled, pipelined
            pl.BlockSpec((H, H), lambda i: (0, 0)),    # Wp: VMEM-resident
            pl.BlockSpec((1, H), lambda i: (0, 0)),    # bp: VMEM-resident
            pl.BlockSpec((1, H), lambda i: (0, 0)),    # wc: VMEM-resident
            pl.BlockSpec(memory_space=pltpu.MemorySpace.SMEM),  # bc scalar
        ],
        out_specs=pl.BlockSpec((tm, 1), lambda i: (i, 0)),
        compiler_params=pltpu.CompilerParams(
            dimension_semantics=("parallel",),   # batch tiles are independent
            vmem_limit_bytes=vmem_limit,
        ),
        cost_estimate=cost,
    )(cls_hidden, wp, bp, wc, bc)
    return out[:, 0]  # squeeze(-1)


def xavier_uniform(key, shape, gain=1.0):
    fan_out, fan_in = shape
    a = gain * math.sqrt(6.0 / (fan_in + fan_out))
    return jax.random.uniform(key, shape, jnp.float32, -a, a)


if __name__ == "__main__":
    key = jax.random.PRNGKey(0)
    k_x, k_pw, k_pb, k_cw = jax.random.split(key, 4)

    B = 20           # not a multiple of the tile -> exercises the partial edge tile
    alpha = 1.0      # args.alpha (gain for classifier xavier init)

    # Deterministic synthetic encoder output (CLS token hidden states).
    cls_hidden = jax.random.normal(k_x, (B, HIDDEN), jnp.float32)

    # BERT pooler parameters (Linear 768 -> 768), PyTorch [out, in] layout.
    pooler_w = xavier_uniform(k_pw, (HIDDEN, HIDDEN))
    pooler_b = jax.random.normal(k_pb, (HIDDEN,), jnp.float32) * 0.02

    # Classifier parameters (Linear 768 -> 1), xavier_uniform with gain=alpha.
    clf_w = xavier_uniform(k_cw, (1, HIDDEN), gain=alpha)
    clf_b = jnp.zeros((1,), jnp.float32)

    # Reference in plain JAX.
    ref = (jnp.tanh(cls_hidden @ pooler_w.T + pooler_b) @ clf_w.T + clf_b)[:, 0]

    # f32 activations + f32 matmul, tiny block -> grid=(3,) with a partial last
    # tile (rows 16..19) and no wrapper-side padding.
    p32 = prepare_head_params(pooler_w, pooler_b, clf_w, clf_b, jnp.float32)
    logits32 = jax.block_until_ready(bert_head_forward(cls_hidden, p32, block_m=8))
    assert logits32.shape == (B,)
    assert jnp.allclose(logits32, ref, atol=1e-4, rtol=1e-4)

    # Default fast path: bf16 activations straight from the encoder (halves the
    # dominant HBM traffic) + bf16 weights, f32 accumulation (MXU-native on
    # v5e/v6e/v7x).  Default block_m; tm is auto-capped so grid >= 2 tiles.
    pbf = prepare_head_params(pooler_w, pooler_b, clf_w, clf_b)  # bf16 default
    x_bf16 = cls_hidden.astype(jnp.bfloat16)
    logitsbf = jax.block_until_ready(bert_head_forward(x_bf16, pbf))
    assert logitsbf.shape == (B,)
    assert jnp.allclose(logitsbf, ref, atol=5e-2, rtol=5e-2)

    print("KERNEL_OK")
</pallas_src>

<mosaic_0001>
module attributes {stable_mosaic.version = 11 : i64} {
  func.func @_head_kernel(%arg0: i32, %arg1: memref<8x768xf32, #tpu.memory_space<vmem>>, %arg2: memref<768x768xf32, #tpu.memory_space<vmem>>, %arg3: memref<1x768xf32, #tpu.memory_space<vmem>>, %arg4: memref<1x768xf32, #tpu.memory_space<vmem>>, %arg5: memref<1xf32, #tpu.memory_space<smem>>, %arg6: memref<8x1xf32, #tpu.memory_space<vmem>>) attributes {dimension_semantics = [#tpu.dimension_semantics<parallel>], iteration_bounds = array<i64: 3>, scalar_prefetch = 0 : i64, scratch_operands = 0 : i64, tpu.core_type = #tpu.core_type<tc>, window_params = [{transform_indices = @transform_0, window_bounds = array<i64: 8, 768>}, {pipeline_mode = #tpu.pipeline_mode<synchronous>, transform_indices = @transform_1, window_bounds = array<i64: 768, 768>}, {pipeline_mode = #tpu.pipeline_mode<synchronous>, transform_indices = @transform_2, window_bounds = array<i64: 1, 768>}, {pipeline_mode = #tpu.pipeline_mode<synchronous>, transform_indices = @transform_3, window_bounds = array<i64: 1, 768>}, {transform_indices = @transform_4, window_bounds = array<i64: 1>}, {transform_indices = @transform_5, window_bounds = array<i64: 8, 1>}]} {
    %c0 = arith.constant 0 : index
    %c0_0 = arith.constant 0 : index
    %0 = vector.load %arg1[%c0, %c0_0] : memref<8x768xf32, #tpu.memory_space<vmem>>, vector<8x768xf32>
    %c0_1 = arith.constant 0 : index
    %c0_2 = arith.constant 0 : index
    %1 = vector.load %arg2[%c0_1, %c0_2] : memref<768x768xf32, #tpu.memory_space<vmem>>, vector<768x768xf32>
    %cst = arith.constant dense<0.000000e+00> : vector<8x768xf32>
    %2 = tpu.matmul %0, %1, %cst {dimension_numbers = #tpu.dot_dimension_numbers<[1], [0], [0], [1], [0, 0, 1, 1], [], []>} : vector<8x768xf32>, vector<768x768xf32>, vector<8x768xf32> -> vector<8x768xf32>
    %c0_3 = arith.constant 0 : index
    %c0_4 = arith.constant 0 : index
    %3 = vector.load %arg3[%c0_3, %c0_4] : memref<1x768xf32, #tpu.memory_space<vmem>>, vector<1x768xf32>
    %4 = vector.broadcast %3 : vector<1x768xf32> to vector<8x768xf32>
    %5 = arith.addf %2, %4 : vector<8x768xf32>
    %6 = math.tanh %5 : vector<8x768xf32>
    %c0_5 = arith.constant 0 : index
    %c0_6 = arith.constant 0 : index
    %7 = vector.load %arg4[%c0_5, %c0_6] : memref<1x768xf32, #tpu.memory_space<vmem>>, vector<1x768xf32>
    %8 = vector.broadcast %7 : vector<1x768xf32> to vector<8x768xf32>
    %9 = arith.mulf %6, %8 : vector<8x768xf32>
    %cst_7 = arith.constant dense<0.000000e+00> : vector<8xf32>
    %10 = vector.multi_reduction <add>, %9, %cst_7 [1] : vector<8x768xf32> to vector<8xf32>
    %11 = vector.shape_cast %10 : vector<8xf32> to vector<8x1xf32>
    %c0_8 = arith.constant 0 : index
    %12 = memref.load %arg5[%c0_8] : memref<1xf32, #tpu.memory_space<smem>>
    %13 = vector.broadcast %12 : f32 to vector<8x1xf32>
    %14 = arith.addf %11, %13 : vector<8x1xf32>
    %c0_9 = arith.constant 0 : index
    %c0_10 = arith.constant 0 : index
    %15 = vector.load %arg6[%c0_9, %c0_10] : memref<8x1xf32, #tpu.memory_space<vmem>>, vector<8x1xf32>
    tpu.vector_store %arg6[%c0_9, %c0_10], %14 {strides = array<i32>} : memref<8x1xf32, #tpu.memory_space<vmem>>, vector<8x1xf32>,
    return
  }
  func.func @transform_0(%arg0: i32) -> (i32, i32) {
    %c0_i32 = arith.constant 0 : i32
    %c0_i32_0 = arith.constant 0 : i32
    return %arg0, %c0_i32 : i32, i32
  }
  func.func @transform_1(%arg0: i32) -> (i32, i32) {
    %c0_i32 = arith.constant 0 : i32
    %c0_i32_0 = arith.constant 0 : i32
    %c0_i32_1 = arith.constant 0 : i32
    return %c0_i32, %c0_i32_0 : i32, i32
  }
  func.func @transform_2(%arg0: i32) -> (i32, i32) {
    %c0_i32 = arith.constant 0 : i32
    %c0_i32_0 = arith.constant 0 : i32
    %c0_i32_1 = arith.constant 0 : i32
    return %c0_i32, %c0_i32_0 : i32, i32
  }
  func.func @transform_3(%arg0: i32) -> (i32, i32) {
    %c0_i32 = arith.constant 0 : i32
    %c0_i32_0 = arith.constant 0 : i32
    %c0_i32_1 = arith.constant 0 : i32
    return %c0_i32, %c0_i32_0 : i32, i32
  }
  func.func @transform_4(%arg0: i32) -> i32 {
    %c0_i32 = arith.constant 0 : i32
    %c0_i32_0 = arith.constant 0 : i32
    return %c0_i32 : i32
  }
  func.func @transform_5(%arg0: i32) -> (i32, i32) {
    %c0_i32 = arith.constant 0 : i32
    %c0_i32_0 = arith.constant 0 : i32
    return %arg0, %c0_i32 : i32, i32
  }
}

</mosaic_0001>

<llo_original>
// kernel: tpu_custom_call.1
$region0: #{tpu_custom_call.1}
  #allocation0 [shape = 'u32[]', space=smem, size = 0x4, offset = 0x4, fixed_abs, tag = 'smem constant byte address 0x4 - core index']
  #allocation1 [shape = 'u32[144,128]{1,0:T(1,128)}', space=vmem, size = 0x12000, scoped, tag = 'internal scratch']
  #allocation2 [shape = 'f32[1]{0:T(128)S(6)}', space=smem, size = 0x200, scoped, tag = 'scoped memory for tpu_custom_call.1']
  %s0 = inlined_call_operand.hbm [shape: f32[20,768], index: 0, kind: input, shape index: {}]
  %s1 = inlined_call_operand.hbm [shape: f32[768,768], index: 1, kind: input, shape index: {}]
  %s2 = inlined_call_operand.hbm [shape: f32[1,768], index: 2, kind: input, shape index: {}]
  %s3 = inlined_call_operand.hbm [shape: f32[1,768], index: 3, kind: input, shape index: {}]
  %s4 = inlined_call_operand.<no memory space> [shape: f32[1], index: 4, kind: input, shape index: {}]
  %s5 = inlined_call_operand.vmem [shape: f32[20,1], index: 5, kind: output, shape index: {}]
  %s6 = sld [smem:[#allocation0]]
  $region69: #{tpu_custom_call.1} parent=0
    _
  %s8 = ssub.s32 1, %s6
  %s9 = scalar_select 0, %s8, %s6
  %10 = sst [smem:[#allocation2]] %s4
  $region1: #{tpu_custom_call.1} parent=0
    #allocation3 [shape = 'u8[49152]{0}', space=vmem, size = 0xc000, scoped, tag = 'input window, operand 0']
    #allocation4 [shape = 's32[2]{0}', space=sflag, size = 0x8, scoped, tag = 'scoped memory for tpu_custom_call.1']
    #allocation5 [shape = 'u8[2359296]{0}', space=vmem, size = 0x240000, scoped, tag = 'input window, operand 1, single buffered']
    #allocation6 [shape = 's32[1]{0}', space=sflag, size = 0x4, scoped, tag = 'scoped memory for tpu_custom_call.1']
    #allocation7 [shape = 'u8[3072]{0}', space=vmem, size = 0xc00, scoped, tag = 'input window, operand 2, single buffered']
    #allocation8 [shape = 'u8[3072]{0}', space=vmem, size = 0xc00, scoped, tag = 'input window, operand 3, single buffered']
    #allocation9 [shape = 's32[1]{0}', space=sflag, size = 0x4, scoped, tag = 'scoped memory for tpu_custom_call.1']
    %11 = vsyncpa [#allocation4], 0
    %s12 = scalar_lea.sflag [#allocation4], 1
    %13 = vsyncpa %s12, 0
    %14 = vsyncpa [#allocation6], 0
    %15 = vsyncpa [#allocation9], 0
    loop: start=0, step=1, limit=5
    $region2: #{tpu_custom_call.1} parent=1 // loop_pre_header
      _
    $region3: #{tpu_custom_call.1} parent=1 // loop_header
      %s17 = sphi 0, %s21
      %p18 = scmp.ge.s32.totalorder %s17, 5
      %s27 = sphi 0, %s29
      %s30 = sphi 0, %s27
      %s31 = sphi 0, %s30
      %s47 = sphi 0, %s31
      %s51 = sphi 0, %s51
      %s53 = sphi 0, %s51
      %s54 = sphi 0, %s53
      %s68 = sphi 0, %s54
      %s72 = sphi 0, %s72
      %s74 = sphi 0, %s72
      %s75 = sphi 0, %s74
      %s89 = sphi 0, %s75
      %s93 = sphi 0, %s93
      %s95 = sphi 0, %s93
      %s96 = sphi 0, %s95
      %s110 = sphi 0, %s96
      %s114 = sphi 0, %s114
      %s116 = sphi 0, %s114
      %s117 = sphi 0, %s116
      %s131 = sphi 0, %s117
      %s137 = sphi 0, %s139
      %s140 = sphi 0, %s137
      %s141 = sphi 0, %s140
      %s157 = sphi 0, %s141
    $region4: #{tpu_custom_call.1} parent=1 // loop_header_branch
      %20 = sbr.rel (%p18) target = $region8
    $region5: #{tpu_custom_call.1} parent=1 // loop_body
      %s22 = ssub.s32 %s17, 1
      %s23 = ssub.s32 %s17, 2
      %s24 = sadd.s32 %s17, 1
      %s25 = ssub.s32 %s17, %s24
      %p26 = scmp.eq.s32.totalorder %s25, 0
      %s28 = sadd.s32 %s27, 1
      %s29 = scalar_select %p26, %s27, %s28
      %p32 = pneg %p26
      %p33 = scmp.eq.s32.totalorder %s17, 2
      %p34 = por %p32, %p33
      %p35 = scmp.ne.s32.totalorder %s27, %s30
      %p36 = scmp.eq.s32.totalorder %s17, 0
      %p37 = por %p35, %p36
      %p38 = scmp.ne.s32.totalorder %s27, %s30
      %p39 = scmp.eq.s32.totalorder %s22, 2
      %p40 = por %p38, %p39
      %p41 = scmp.ne.s32.totalorder %s30, %s31
      %p42 = scmp.eq.s32.totalorder %s22, 0
      %p43 = por %p41, %p42
      %p44 = scmp.ne.s32.totalorder %s30, %s31
      %p45 = scmp.eq.s32.totalorder %s23, 2
      %p46 = por %p44, %p45
      %p48 = scmp.ne.s32.totalorder %s31, %s47
      %p49 = scmp.eq.s32.totalorder %s23, 0
      %p50 = por %p48, %p49
      %s52 = sadd.s32 %s51, 1
      %p55 = scmp.eq.s32.totalorder %s17, 2
      %p56 = scmp.ne.s32.totalorder %s51, %s53
      %p57 = scmp.eq.s32.totalorder %s17, 0
      %p58 = por %p56, %p57
      %p59 = scmp.ne.s32.totalorder %s51, %s53
      %p60 = scmp.eq.s32.totalorder %s22, 2
      %p61 = por %p59, %p60
      %p62 = scmp.ne.s32.totalorder %s53, %s54
      %p63 = scmp.eq.s32.totalorder %s22, 0
      %p64 = por %p62, %p63
      %p65 = scmp.ne.s32.totalorder %s53, %s54
      %p66 = scmp.eq.s32.totalorder %s23, 2
      %p67 = por %p65, %p66
      %p69 = scmp.ne.s32.totalorder %s54, %s68
      %p70 = scmp.eq.s32.totalorder %s23, 0
      %p71 = por %p69, %p70
      %s73 = sadd.s32 %s72, 1
      %p76 = scmp.eq.s32.totalorder %s17, 2
      %p77 = scmp.ne.s32.totalorder %s72, %s74
      %p78 = scmp.eq.s32.totalorder %s17, 0
      %p79 = por %p77, %p78
      %p80 = scmp.ne.s32.totalorder %s72, %s74
      %p81 = scmp.eq.s32.totalorder %s22, 2
      %p82 = por %p80, %p81
      %p83 = scmp.ne.s32.totalorder %s74, %s75
      %p84 = scmp.eq.s32.totalorder %s22, 0
      %p85 = por %p83, %p84
      %p86 = scmp.ne.s32.totalorder %s74, %s75
      %p87 = scmp.eq.s32.totalorder %s23, 2
      %p88 = por %p86, %p87
      %p90 = scmp.ne.s32.totalorder %s75, %s89
      %p91 = scmp.eq.s32.totalorder %s23, 0
      %p92 = por %p90, %p91
      %s94 = sadd.s32 %s93, 1
      %p97 = scmp.eq.s32.totalorder %s17, 2
      %p98 = scmp.ne.s32.totalorder %s93, %s95
      %p99 = scmp.eq.s32.totalorder %s17, 0
      %p100 = por %p98, %p99
      %p101 = scmp.ne.s32.totalorder %s93, %s95
      %p102 = scmp.eq.s32.totalorder %s22, 2
      %p103 = por %p101, %p102
      %p104 = scmp.ne.s32.totalorder %s95, %s96
      %p105 = scmp.eq.s32.totalorder %s22, 0
      %p106 = por %p104, %p105
      %p107 = scmp.ne.s32.totalorder %s95, %s96
      %p108 = scmp.eq.s32.totalorder %s23, 2
      %p109 = por %p107, %p108
      %p111 = scmp.ne.s32.totalorder %s96, %s110
      %p112 = scmp.eq.s32.totalorder %s23, 0
      %p113 = por %p111, %p112
      %s115 = sadd.s32 %s114, 1
      %p118 = scmp.eq.s32.totalorder %s17, 2
      %p119 = scmp.ne.s32.totalorder %s114, %s116
      %p120 = scmp.eq.s32.totalorder %s17, 0
      %p121 = por %p119, %p120
      %p122 = scmp.ne.s32.totalorder %s114, %s116
      %p123 = scmp.eq.s32.totalorder %s22, 2
      %p124 = por %p122, %p123
      %p125 = scmp.ne.s32.totalorder %s116, %s117
      %p126 = scmp.eq.s32.totalorder %s22, 0
      %p127 = por %p125, %p126
      %p128 = scmp.ne.s32.totalorder %s116, %s117
      %p129 = scmp.eq.s32.totalorder %s23, 2
      %p130 = por %p128, %p129
      %p132 = scmp.ne.s32.totalorder %s117, %s131
      %p133 = scmp.eq.s32.totalorder %s23, 0
      %p134 = por %p132, %p133
      %s135 = ssub.s32 %s17, %s24
      %p136 = scmp.eq.s32.totalorder %s135, 0
      %s138 = sadd.s32 %s137, 1
      %s139 = scalar_select %p136, %s137, %s138
      %p142 = pneg %p136
      %p143 = scmp.eq.s32.totalorder %s17, 2
      %p144 = por %p142, %p143
      %p145 = scmp.ne.s32.totalorder %s137, %s140
      %p146 = scmp.eq.s32.totalorder %s17, 0
      %p147 = por %p145, %p146
      %p148 = scmp.ne.s32.totalorder %s137, %s140
      %p149 = scmp.eq.s32.totalorder %s22, 2
      %p150 = por %p148, %p149
      %p151 = scmp.ne.s32.totalorder %s140, %s141
      %p152 = scmp.eq.s32.totalorder %s22, 0
      %p153 = por %p151, %p152
      %p154 = scmp.ne.s32.totalorder %s140, %s141
      %p155 = scmp.eq.s32.totalorder %s23, 2
      %p156 = por %p154, %p155
      %p158 = scmp.ne.s32.totalorder %s141, %s157
      %p159 = scmp.eq.s32.totalorder %s23, 0
      %p160 = por %p158, %p159
      %p161 = scmp.le.s32.totalorder 1, %s17
      %p162 = scmp.lt.s32.totalorder %s17, 4
      %p163 = pnand %p161, %p162
      %p164 = pneg %p163
      // Predicated region
      $region9: #{tpu_custom_call.1} parent=5 // pred_check
        _
      $region10: #{tpu_custom_call.1} parent=5 // pred_check_branch
        %166 = sbr.rel (%p163) target = $region12
      $region11: #{tpu_custom_call.1} parent=5 // pred_region
        %s167 = ssub.s32 %s17, 1
        // Predicated region
        $region13: #{tpu_custom_call.1} parent=11 // pred_check
          %p168 = pneg %p64
        $region14: #{tpu_custom_call.1} parent=11 // pred_check_branch
          %170 = sbr.rel (%p168) target = $region16
        $region15: #{tpu_custom_call.1} parent=11 // pred_region
          %s172 = ssub.s32 73728, 73728
          %173 = vsyncadd [#allocation6], %s172
          %s174 = sshll.u32 [#allocation5], 4
          %s175 = int_to_ptr.vmem [resolvable:$true] %s174
          %180 = dma.hbm_to_vmem [thread:$0]  %s1, 73728, %s175, [#allocation6], 768, 768, 48
        $region16: #{tpu_custom_call.1} parent=11 // pred_fallthru
          _
        // Predicated region
        $region17: #{tpu_custom_call.1} parent=11 // pred_check
          %p181 = pneg %p85
        $region18: #{tpu_custom_call.1} parent=11 // pred_check_branch
          %183 = sbr.rel (%p181) target = $region20
        $region19: #{tpu_custom_call.1} parent=11 // pred_region
          %s185 = ssub.s32 96, 96
          %186 = vsyncadd [#allocation6], %s185
          %s188 = sshll.u32 [#allocation7], 4
          %s189 = int_to_ptr.vmem [resolvable:$true] %s188
          %191 = dma.hbm_to_vmem [thread:$0]  %s2, 96, %s189, [#allocation6]
        $region20: #{tpu_custom_call.1} parent=11 // pred_fallthru
          _
        // Predicated region
        $region21: #{tpu_custom_call.1} parent=11 // pred_check
          %p192 = pneg %p106
        $region22: #{tpu_custom_call.1} parent=11 // pred_check_branch
          %194 = sbr.rel (%p192) target = $region24
        $region23: #{tpu_custom_call.1} parent=11 // pred_region
          %s196 = ssub.s32 96, 96
          %197 = vsyncadd [#allocation9], %s196
          %s199 = sshll.u32 [#allocation8], 4
          %s200 = int_to_ptr.vmem [resolvable:$true] %s199
          %202 = dma.hbm_to_vmem [thread:$0]  %s3, 96, %s200, [#allocation9]
        $region24: #{tpu_custom_call.1} parent=11 // pred_fallthru
          _
        // Predicated region
        $region25: #{tpu_custom_call.1} parent=11 // pred_check
          %p203 = pneg %p127
        $region26: #{tpu_custom_call.1} parent=11 // pred_check_branch
          %205 = sbr.rel (%p203) target = $region28
        $region27: #{tpu_custom_call.1} parent=11 // pred_region
          _
        $region28: #{tpu_custom_call.1} parent=11 // pred_fallthru
          _
      $region12: #{tpu_custom_call.1} parent=5 // pred_fallthru
        _
      %p206 = scmp.lt.s32.totalorder %s17, 3
      // Predicated region
      $region29: #{tpu_custom_call.1} parent=5 // pred_check
        %p207 = pneg %p206
      $region30: #{tpu_custom_call.1} parent=5 // pred_check_branch
        %209 = sbr.rel (%p207) target = $region32
      $region31: #{tpu_custom_call.1} parent=5 // pred_region
        // Predicated region
        $region33: #{tpu_custom_call.1} parent=31 // pred_check
          %p210 = pneg %p37
        $region34: #{tpu_custom_call.1} parent=31 // pred_check_branch
          %212 = sbr.rel (%p210) target = $region36
        $region35: #{tpu_custom_call.1} parent=31 // pred_region
          %s213 = sand.u32 %s27, 1
          %s214 = scalar_lea.sflag [#allocation4], %s213
          %s215 = sand.u32 %s27, 1
          %s216 = smul.addr %s215, 48
          %s217 = scalar_lea.vmem [#allocation3], %s216
          %s219 = ssub.s32 768, 768
          %220 = vsyncadd %s214, %s219
          %s221 = smul.addr %s17, 6
          %s222 = smul.addr %s221, 128
          %s223 = scalar_lea.hbm %s0, %s222
          %s225 = sshll.u32 %s217, 4
          %s226 = int_to_ptr.vmem [resolvable:$true] %s225
          %228 = dma.hbm_to_vmem [thread:$0]  %s223, 768, %s226, %s214
        $region36: #{tpu_custom_call.1} parent=31 // pred_fallthru
          _
      $region32: #{tpu_custom_call.1} parent=5 // pred_fallthru
        _
      %p229 = scmp.le.s32.totalorder 1, %s17
      %p230 = scmp.lt.s32.totalorder %s17, 4
      %p231 = pnand %p229, %p230
      %p232 = pneg %p231
      // Predicated region
      $region37: #{tpu_custom_call.1} parent=5 // pred_check
        _
      $region38: #{tpu_custom_call.1} parent=5 // pred_check_branch
        %234 = sbr.rel (%p231) target = $region40
      $region39: #{tpu_custom_call.1} parent=5 // pred_region
        %s235 = ssub.s32 %s17, 1
        %s236 = sand.u32 %s30, 1
        %s237 = scalar_lea.sflag [#allocation4], %s236
        %s238 = sand.u32 %s30, 1
        %s239 = smul.addr %s238, 48
        %s240 = scalar_lea.vmem [#allocation3], %s239
        // Predicated region
        $region41: #{tpu_custom_call.1} parent=39 // pred_check
          %p241 = pneg %p43
        $region42: #{tpu_custom_call.1} parent=39 // pred_check_branch
          %243 = sbr.rel (%p241) target = $region44
        $region43: #{tpu_custom_call.1} parent=39 // pred_region
          %244 = dma.done %s237, 768
        $region44: #{tpu_custom_call.1} parent=39 // pred_fallthru
          _
        // Predicated region
        $region45: #{tpu_custom_call.1} parent=39 // pred_check
          %p245 = pneg %p64
        $region46: #{tpu_custom_call.1} parent=39 // pred_check_branch
          %247 = sbr.rel (%p245) target = $region48
        $region47: #{tpu_custom_call.1} parent=39 // pred_region
          %248 = dma.done [#allocation6], 73728
        $region48: #{tpu_custom_call.1} parent=39 // pred_fallthru
          _
        // Predicated region
        $region49: #{tpu_custom_call.1} parent=39 // pred_check
          %p249 = pneg %p85
        $region50: #{tpu_custom_call.1} parent=39 // pred_check_branch
          %251 = sbr.rel (%p249) target = $region52
        $region51: #{tpu_custom_call.1} parent=39 // pred_region
          %252 = dma.done [#allocation6], 96
        $region52: #{tpu_custom_call.1} parent=39 // pred_fallthru
          _
        // Predicated region
        $region53: #{tpu_custom_call.1} parent=39 // pred_check
          %p253 = pneg %p106
        $region54: #{tpu_custom_call.1} parent=39 // pred_check_branch
          %255 = sbr.rel (%p253) target = $region56
        $region55: #{tpu_custom_call.1} parent=39 // pred_region
          %256 = dma.done [#allocation9], 96
        $region56: #{tpu_custom_call.1} parent=39 // pred_fallthru
          _
        %s257 = sand.u32 %s30, 1
        %s258 = scalar_lea.sflag [#allocation4], %s257
        %s259 = sand.u32 %s30, 1
        %s260 = smul.addr %s259, 48
        %s261 = scalar_lea.vmem [#allocation3], %s260
        %p262 = pneg %p43
        %p263 = pneg %p40
        %p264 = pneg %p64
        %p265 = pneg %p61
        %p266 = pneg %p85
        %p267 = pneg %p82
        %p268 = pneg %p106
        %p269 = pneg %p103
        %p270 = pneg %p127
        %p271 = pneg %p124
        %p272 = pneg %p153
        %p273 = pneg %p150
        %p274 = scmp.lt.s32.totalorder %s22, 2
        %s275 = scalar_select %p274, %s22, 2
        %s276 = smul.addr %s275, 8
        %s277 = scalar_lea.vmem %s5, %s276
        %p278 = scmp.lt.s32.totalorder %s22, 2
        %s279 = scalar_select %p278, %s22, 2
        %s280 = smul.addr %s279, 8
        %s281 = scalar_lea.vmem %s5, %s280
        %v282 = vld [vmem:[%s240] sm:$0xff]
        %v283 = vld [vmem:[%s240 + $0x8] sm:$0xff]
        %v284 = vld [vmem:[%s240 + $0x10] sm:$0xff]
        %v285 = vld [vmem:[%s240 + $0x18] sm:$0xff]
        %v286 = vld [vmem:[%s240 + $0x20] sm:$0xff]
        %v287 = vld [vmem:[%s240 + $0x28] sm:$0xff]
        %v288 = vld [vmem:[#allocation5] sm:$0xff]
        %v289 = vld [vmem:[#allocation5 + $0x8] sm:$0xff]
        %v290 = vld [vmem:[#allocation5 + $0x10] sm:$0xff]
        %v291 = vld [vmem:[#allocation5 + $0x18] sm:$0xff]
        %v292 = vld [vmem:[#allocation5 + $0x20] sm:$0xff]
        %v293 = vld [vmem:[#allocation5 + $0x28] sm:$0xff]
        %v294 = vld [vmem:[#allocation5 + $0x30] sm:$0xff]
        %v295 = vld [vmem:[#allocation5 + $0x38] sm:$0xff]
        %v296 = vld [vmem:[#allocation5 + $0x40] sm:$0xff]
        %v297 = vld [vmem:[#allocation5 + $0x48] sm:$0xff]
        %v298 = vld [vmem:[#allocation5 + $0x50] sm:$0xff]
        %v299 = vld [vmem:[#allocation5 + $0x58] sm:$0xff]
        %v300 = vld [vmem:[#allocation5 + $0x60] sm:$0xff]
        %v301 = vld [vmem:[#allocation5 + $0x68] sm:$0xff]
        %v302 = vld [vmem:[#allocation5 + $0x70] sm:$0xff]
        %v303 = vld [vmem:[#allocation5 + $0x78] sm:$0xff]
        %v304 = vld [vmem:[#allocation5 + $0x80] sm:$0xff]
        %v305 = vld [vmem:[#allocation5 + $0x88] sm:$0xff]
        %v306 = vld [vmem:[#allocation5 + $0x90] sm:$0xff]
        %v307 = vld [vmem:[#allocation5 + $0x98] sm:$0xff]
        %v308 = vld [vmem:[#allocation5 + $0xa0] sm:$0xff]
        %v309 = vld [vmem:[#allocation5 + $0xa8] sm:$0xff]
        %v310 = vld [vmem:[#allocation5 + $0xb0] sm:$0xff]
        %v311 = vld [vmem:[#allocation5 + $0xb8] sm:$0xff]
        %v312 = vld [vmem:[#allocation5 + $0xc0] sm:$0xff]
        %v313 = vld [vmem:[#allocation5 + $0xc8] sm:$0xff]
        %v314 = vld [vmem:[#allocation5 + $0xd0] sm:$0xff]
        %v315 = vld [vmem:[#allocation5 + $0xd8] sm:$0xff]
        %v316 = vld [vmem:[#allocation5 + $0xe0] sm:$0xff]
        %v317 = vld [vmem:[#allocation5 + $0xe8] sm:$0xff]
        %v318 = vld [vmem:[#allocation5 + $0xf0] sm:$0xff]
        %v319 = vld [vmem:[#allocation5 + $0xf8] sm:$0xff]
        %v320 = vld [vmem:[#allocation5 + $0x100] sm:$0xff]
        %v321 = vld [vmem:[#allocation5 + $0x108] sm:$0xff]
        %v322 = vld [vmem:[#allocation5 + $0x110] sm:$0xff]
        %v323 = vld [vmem:[#allocation5 + $0x118] sm:$0xff]
        %v324 = vld [vmem:[#allocation5 + $0x120] sm:$0xff]
        %v325 = vld [vmem:[#allocation5 + $0x128] sm:$0xff]
        %v326 = vld [vmem:[#allocation5 + $0x130] sm:$0xff]
        %v327 = vld [vmem:[#allocation5 + $0x138] sm:$0xff]
        %v328 = vld [vmem:[#allocation5 + $0x140] sm:$0xff]
        %v329 = vld [vmem:[#allocation5 + $0x148] sm:$0xff]
        %v330 = vld [vmem:[#allocation5 + $0x150] sm:$0xff]
        %v331 = vld [vmem:[#allocation5 + $0x158] sm:$0xff]
        %v332 = vld [vmem:[#allocation5 + $0x160] sm:$0xff]
        %v333 = vld [vmem:[#allocation5 + $0x168] sm:$0xff]
        %v334 = vld [vmem:[#allocation5 + $0x170] sm:$0xff]
        %v335 = vld [vmem:[#allocation5 + $0x178] sm:$0xff]
        %v336 = vld [vmem:[#allocation5 + $0x180] sm:$0xff]
        %v337 = vld [vmem:[#allocation5 + $0x188] sm:$0xff]
        %v338 = vld [vmem:[#allocation5 + $0x190] sm:$0xff]
        %v339 = vld [vmem:[#allocation5 + $0x198] sm:$0xff]
        %v340 = vld [vmem:[#allocation5 + $0x1a0] sm:$0xff]
        %v341 = vld [vmem:[#allocation5 + $0x1a8] sm:$0xff]
        %v342 = vld [vmem:[#allocation5 + $0x1b0] sm:$0xff]
        %v343 = vld [vmem:[#allocation5 + $0x1b8] sm:$0xff]
        %v344 = vld [vmem:[#allocation5 + $0x1c0] sm:$0xff]
        %v345 = vld [vmem:[#allocation5 + $0x1c8] sm:$0xff]
        %v346 = vld [vmem:[#allocation5 + $0x1d0] sm:$0xff]
        %v347 = vld [vmem:[#allocation5 + $0x1d8] sm:$0xff]
        %v348 = vld [vmem:[#allocation5 + $0x1e0] sm:$0xff]
        %v349 = vld [vmem:[#allocation5 + $0x1e8] sm:$0xff]
        %v350 = vld [vmem:[#allocation5 + $0x1f0] sm:$0xff]
        %v351 = vld [vmem:[#allocation5 + $0x1f8] sm:$0xff]
        %v352 = vld [vmem:[#allocation5 + $0x200] sm:$0xff]
        %v353 = vld [vmem:[#allocation5 + $0x208] sm:$0xff]
        %v354 = vld [vmem:[#allocation5 + $0x210] sm:$0xff]
        %v355 = vld [vmem:[#allocation5 + $0x218] sm:$0xff]
        %v356 = vld [vmem:[#allocation5 + $0x220] sm:$0xff]
        %v357 = vld [vmem:[#allocation5 + $0x228] sm:$0xff]
        %v358 = vld [vmem:[#allocation5 + $0x230] sm:$0xff]
        %v359 = vld [vmem:[#allocation5 + $0x238] sm:$0xff]
        %v360 = vld [vmem:[#allocation5 + $0x240] sm:$0xff]
        %v361 = vld [vmem:[#allocation5 + $0x248] sm:$0xff]
        %v362 = vld [vmem:[#allocation5 + $0x250] sm:$0xff]
        %v363 = vld [vmem:[#allocation5 + $0x258] sm:$0xff]
        %v364 = vld [vmem:[#allocation5 + $0x260] sm:$0xff]
        %v365 = vld [vmem:[#allocation5 + $0x268] sm:$0xff]
        %v366 = vld [vmem:[#allocation5 + $0x270] sm:$0xff]
        %v367 = vld [vmem:[#allocation5 + $0x278] sm:$0xff]
        %v368 = vld [vmem:[#allocation5 + $0x280] sm:$0xff]
        %v369 = vld [vmem:[#allocation5 + $0x288] sm:$0xff]
        %v370 = vld [vmem:[#allocation5 + $0x290] sm:$0xff]
        %v371 = vld [vmem:[#allocation5 + $0x298] sm:$0xff]
        %v372 = vld [vmem:[#allocation5 + $0x2a0] sm:$0xff]
        %v373 = vld [vmem:[#allocation5 + $0x2a8] sm:$0xff]
        %v374 = vld [vmem:[#allocation5 + $0x2b0] sm:$0xff]
        %v375 = vld [vmem:[#allocation5 + $0x2b8] sm:$0xff]
        %v376 = vld [vmem:[#allocation5 + $0x2c0] sm:$0xff]
        %v377 = vld [vmem:[#allocation5 + $0x2c8] sm:$0xff]
        %v378 = vld [vmem:[#allocation5 + $0x2d0] sm:$0xff]
        %v379 = vld [vmem:[#allocation5 + $0x2d8] sm:$0xff]
        %v380 = vld [vmem:[#allocation5 + $0x2e0] sm:$0xff]
        %v381 = vld [vmem:[#allocation5 + $0x2e8] sm:$0xff]
        %v382 = vld [vmem:[#allocation5 + $0x2f0] sm:$0xff]
        %v383 = vld [vmem:[#allocation5 + $0x2f8] sm:$0xff]
        %v384 = vld [vmem:[#allocation5 + $0x300] sm:$0xff]
        %v385 = vld [vmem:[#allocation5 + $0x308] sm:$0xff]
        %v386 = vld [vmem:[#allocation5 + $0x310] sm:$0xff]
        %v387 = vld [vmem:[#allocation5 + $0x318] sm:$0xff]
        %v388 = vld [vmem:[#allocation5 + $0x320] sm:$0xff]
        %v389 = vld [vmem:[#allocation5 + $0x328] sm:$0xff]
        %v390 = vld [vmem:[#allocation5 + $0x330] sm:$0xff]
        %v391 = vld [vmem:[#allocation5 + $0x338] sm:$0xff]
        %v392 = vld [vmem:[#allocation5 + $0x340] sm:$0xff]
        %v393 = vld [vmem:[#allocation5 + $0x348] sm:$0xff]
        %v394 = vld [vmem:[#allocation5 + $0x350] sm:$0xff]
        %v395 = vld [vmem:[#allocation5 + $0x358] sm:$0xff]
        %v396 = vld [vmem:[#allocation5 + $0x360] sm:$0xff]
        %v397 = vld [vmem:[#allocation5 + $0x368] sm:$0xff]
        %v398 = vld [vmem:[#allocation5 + $0x370] sm:$0xff]
        %v399 = vld [vmem:[#allocation5 + $0x378] sm:$0xff]
        %v400 = vld [vmem:[#allocation5 + $0x380] sm:$0xff]
        %v401 = vld [vmem:[#allocation5 + $0x388] sm:$0xff]
        %v402 = vld [vmem:[#allocation5 + $0x390] sm:$0xff]
        %v403 = vld [vmem:[#allocation5 + $0x398] sm:$0xff]
        %v404 = vld [vmem:[#allocation5 + $0x3a0] sm:$0xff]
        %v405 = vld [vmem:[#allocation5 + $0x3a8] sm:$0xff]
        %v406 = vld [vmem:[#allocation5 + $0x3b0] sm:$0xff]
        %v407 = vld [vmem:[#allocation5 + $0x3b8] sm:$0xff]
        %v408 = vld [vmem:[#allocation5 + $0x3c0] sm:$0xff]
        %v409 = vld [vmem:[#allocation5 + $0x3c8] sm:$0xff]
        %v410 = vld [vmem:[#allocation5 + $0x3d0] sm:$0xff]
        %v411 = vld [vmem:[#allocation5 + $0x3d8] sm:$0xff]
        %v412 = vld [vmem:[#allocation5 + $0x3e0] sm:$0xff]
        %v413 = vld [vmem:[#allocation5 + $0x3e8] sm:$0xff]
        %v414 = vld [vmem:[#allocation5 + $0x3f0] sm:$0xff]
        %v415 = vld [vmem:[#allocation5 + $0x3f8] sm:$0xff]
        %v416 = vld [vmem:[#allocation5 + $0x400] sm:$0xff]
        %v417 = vld [vmem:[#allocation5 + $0x408] sm:$0xff]
        %v418 = vld [vmem:[#allocation5 + $0x410] sm:$0xff]
        %v419 = vld [vmem:[#allocation5 + $0x418] sm:$0xff]
        %v420 = vld [vmem:[#allocation5 + $0x420] sm:$0xff]
        %v421 = vld [vmem:[#allocation5 + $0x428] sm:$0xff]
        %v422 = vld [vmem:[#allocation5 + $0x430] sm:$0xff]
        %v423 = vld [vmem:[#allocation5 + $0x438] sm:$0xff]
        %v424 = vld [vmem:[#allocation5 + $0x440] sm:$0xff]
        %v425 = vld [vmem:[#allocation5 + $0x448] sm:$0xff]
        %v426 = vld [vmem:[#allocation5 + $0x450] sm:$0xff]
        %v427 = vld [vmem:[#allocation5 + $0x458] sm:$0xff]
        %v428 = vld [vmem:[#allocation5 + $0x460] sm:$0xff]
        %v429 = vld [vmem:[#allocation5 + $0x468] sm:$0xff]
        %v430 = vld [vmem:[#allocation5 + $0x470] sm:$0xff]
        %v431 = vld [vmem:[#allocation5 + $0x478] sm:$0xff]
        %v432 = vld [vmem:[#allocation5 + $0x480] sm:$0xff]
        %v433 = vld [vmem:[#allocation5 + $0x488] sm:$0xff]
        %v434 = vld [vmem:[#allocation5 + $0x490] sm:$0xff]
        %v435 = vld [vmem:[#allocation5 + $0x498] sm:$0xff]
        %v436 = vld [vmem:[#allocation5 + $0x4a0] sm:$0xff]
        %v437 = vld [vmem:[#allocation5 + $0x4a8] sm:$0xff]
        %v438 = vld [vmem:[#allocation5 + $0x4b0] sm:$0xff]
        %v439 = vld [vmem:[#allocation5 + $0x4b8] sm:$0xff]
        %v440 = vld [vmem:[#allocation5 + $0x4c0] sm:$0xff]
        %v441 = vld [vmem:[#allocation5 + $0x4c8] sm:$0xff]
        %v442 = vld [vmem:[#allocation5 + $0x4d0] sm:$0xff]
        %v443 = vld [vmem:[#allocation5 + $0x4d8] sm:$0xff]
        %v444 = vld [vmem:[#allocation5 + $0x4e0] sm:$0xff]
        %v445 = vld [vmem:[#allocation5 + $0x4e8] sm:$0xff]
        %v446 = vld [vmem:[#allocation5 + $0x4f0] sm:$0xff]
        %v447 = vld [vmem:[#allocation5 + $0x4f8] sm:$0xff]
        %v448 = vld [vmem:[#allocation5 + $0x500] sm:$0xff]
        %v449 = vld [vmem:[#allocation5 + $0x508] sm:$0xff]
        %v450 = vld [vmem:[#allocation5 + $0x510] sm:$0xff]
        %v451 = vld [vmem:[#allocation5 + $0x518] sm:$0xff]
        %v452 = vld [vmem:[#allocation5 + $0x520] sm:$0xff]
        %v453 = vld [vmem:[#allocation5 + $0x528] sm:$0xff]
        %v454 = vld [vmem:[#allocation5 + $0x530] sm:$0xff]
        %v455 = vld [vmem:[#allocation5 + $0x538] sm:$0xff]
        %v456 = vld [vmem:[#allocation5 + $0x540] sm:$0xff]
        %v457 = vld [vmem:[#allocation5 + $0x548] sm:$0xff]
        %v458 = vld [vmem:[#allocation5 + $0x550] sm:$0xff]
        %v459 = vld [vmem:[#allocation5 + $0x558] sm:$0xff]
        %v460 = vld [vmem:[#allocation5 + $0x560] sm:$0xff]
        %v461 = vld [vmem:[#allocation5 + $0x568] sm:$0xff]
        %v462 = vld [vmem:[#allocation5 + $0x570] sm:$0xff]
        %v463 = vld [vmem:[#allocation5 + $0x578] sm:$0xff]
        %v464 = vld [vmem:[#allocation5 + $0x580] sm:$0xff]
        %v465 = vld [vmem:[#allocation5 + $0x588] sm:$0xff]
        %v466 = vld [vmem:[#allocation5 + $0x590] sm:$0xff]
        %v467 = vld [vmem:[#allocation5 + $0x598] sm:$0xff]
        %v468 = vld [vmem:[#allocation5 + $0x5a0] sm:$0xff]
        %v469 = vld [vmem:[#allocation5 + $0x5a8] sm:$0xff]
        %v470 = vld [vmem:[#allocation5 + $0x5b0] sm:$0xff]
        %v471 = vld [vmem:[#allocation5 + $0x5b8] sm:$0xff]
        %v472 = vld [vmem:[#allocation5 + $0x5c0] sm:$0xff]
        %v473 = vld [vmem:[#allocation5 + $0x5c8] sm:$0xff]
        %v474 = vld [vmem:[#allocation5 + $0x5d0] sm:$0xff]
        %v475 = vld [vmem:[#allocation5 + $0x5d8] sm:$0xff]
        %v476 = vld [vmem:[#allocation5 + $0x5e0] sm:$0xff]
        %v477 = vld [vmem:[#allocation5 + $0x5e8] sm:$0xff]
        %v478 = vld [vmem:[#allocation5 + $0x5f0] sm:$0xff]
        %v479 = vld [vmem:[#allocation5 + $0x5f8] sm:$0xff]
        %v480 = vld [vmem:[#allocation5 + $0x600] sm:$0xff]
        %v481 = vld [vmem:[#allocation5 + $0x608] sm:$0xff]
        %v482 = vld [vmem:[#allocation5 + $0x610] sm:$0xff]
        %v483 = vld [vmem:[#allocation5 + $0x618] sm:$0xff]
        %v484 = vld [vmem:[#allocation5 + $0x620] sm:$0xff]
        %v485 = vld [vmem:[#allocation5 + $0x628] sm:$0xff]
        %v486 = vld [vmem:[#allocation5 + $0x630] sm:$0xff]
        %v487 = vld [vmem:[#allocation5 + $0x638] sm:$0xff]
        %v488 = vld [vmem:[#allocation5 + $0x640] sm:$0xff]
        %v489 = vld [vmem:[#allocation5 + $0x648] sm:$0xff]
        %v490 = vld [vmem:[#allocation5 + $0x650] sm:$0xff]
        %v491 = vld [vmem:[#allocation5 + $0x658] sm:$0xff]
        %v492 = vld [vmem:[#allocation5 + $0x660] sm:$0xff]
        %v493 = vld [vmem:[#allocation5 + $0x668] sm:$0xff]
        %v494 = vld [vmem:[#allocation5 + $0x670] sm:$0xff]
        %v495 = vld [vmem:[#allocation5 + $0x678] sm:$0xff]
        %v496 = vld [vmem:[#allocation5 + $0x680] sm:$0xff]
        %v497 = vld [vmem:[#allocation5 + $0x688] sm:$0xff]
        %v498 = vld [vmem:[#allocation5 + $0x690] sm:$0xff]
        %v499 = vld [vmem:[#allocation5 + $0x698] sm:$0xff]
        %v500 = vld [vmem:[#allocation5 + $0x6a0] sm:$0xff]
        %v501 = vld [vmem:[#allocation5 + $0x6a8] sm:$0xff]
        %v502 = vld [vmem:[#allocation5 + $0x6b0] sm:$0xff]
        %v503 = vld [vmem:[#allocation5 + $0x6b8] sm:$0xff]
        %v504 = vld [vmem:[#allocation5 + $0x6c0] sm:$0xff]
        %v505 = vld [vmem:[#allocation5 + $0x6c8] sm:$0xff]
        %v506 = vld [vmem:[#allocation5 + $0x6d0] sm:$0xff]
        %v507 = vld [vmem:[#allocation5 + $0x6d8] sm:$0xff]
        %v508 = vld [vmem:[#allocation5 + $0x6e0] sm:$0xff]
        %v509 = vld [vmem:[#allocation5 + $0x6e8] sm:$0xff]
        %v510 = vld [vmem:[#allocation5 + $0x6f0] sm:$0xff]
        %v511 = vld [vmem:[#allocation5 + $0x6f8] sm:$0xff]
        %v512 = vld [vmem:[#allocation5 + $0x700] sm:$0xff]
        %v513 = vld [vmem:[#allocation5 + $0x708] sm:$0xff]
        %v514 = vld [vmem:[#allocation5 + $0x710] sm:$0xff]
        %v515 = vld [vmem:[#allocation5 + $0x718] sm:$0xff]
        %v516 = vld [vmem:[#allocation5 + $0x720] sm:$0xff]
        %v517 = vld [vmem:[#allocation5 + $0x728] sm:$0xff]
        %v518 = vld [vmem:[#allocation5 + $0x730] sm:$0xff]
        %v519 = vld [vmem:[#allocation5 + $0x738] sm:$0xff]
        %v520 = vld [vmem:[#allocation5 + $0x740] sm:$0xff]
        %v521 = vld [vmem:[#allocation5 + $0x748] sm:$0xff]
        %v522 = vld [vmem:[#allocation5 + $0x750] sm:$0xff]
        %v523 = vld [vmem:[#allocation5 + $0x758] sm:$0xff]
        %v524 = vld [vmem:[#allocation5 + $0x760] sm:$0xff]
        %v525 = vld [vmem:[#allocation5 + $0x768] sm:$0xff]
        %v526 = vld [vmem:[#allocation5 + $0x770] sm:$0xff]
        %v527 = vld [vmem:[#allocation5 + $0x778] sm:$0xff]
        %v528 = vld [vmem:[#allocation5 + $0x780] sm:$0xff]
        %v529 = vld [vmem:[#allocation5 + $0x788] sm:$0xff]
        %v530 = vld [vmem:[#allocation5 + $0x790] sm:$0xff]
        %v531 = vld [vmem:[#allocation5 + $0x798] sm:$0xff]
        %v532 = vld [vmem:[#allocation5 + $0x7a0] sm:$0xff]
        %v533 = vld [vmem:[#allocation5 + $0x7a8] sm:$0xff]
        %v534 = vld [vmem:[#allocation5 + $0x7b0] sm:$0xff]
        %v535 = vld [vmem:[#allocation5 + $0x7b8] sm:$0xff]
        %v536 = vld [vmem:[#allocation5 + $0x7c0] sm:$0xff]
        %v537 = vld [vmem:[#allocation5 + $0x7c8] sm:$0xff]
        %v538 = vld [vmem:[#allocation5 + $0x7d0] sm:$0xff]
        %v539 = vld [vmem:[#allocation5 + $0x7d8] sm:$0xff]
        %v540 = vld [vmem:[#allocation5 + $0x7e0] sm:$0xff]
        %v541 = vld [vmem:[#allocation5 + $0x7e8] sm:$0xff]
        %v542 = vld [vmem:[#allocation5 + $0x7f0] sm:$0xff]
        %v543 = vld [vmem:[#allocation5 + $0x7f8] sm:$0xff]
        %v544 = vld [vmem:[#allocation5 + $0x800] sm:$0xff]
        %v545 = vld [vmem:[#allocation5 + $0x808] sm:$0xff]
        %v546 = vld [vmem:[#allocation5 + $0x810] sm:$0xff]
        %v547 = vld [vmem:[#allocation5 + $0x818] sm:$0xff]
        %v548 = vld [vmem:[#allocation5 + $0x820] sm:$0xff]
        %v549 = vld [vmem:[#allocation5 + $0x828] sm:$0xff]
        %v550 = vld [vmem:[#allocation5 + $0x830] sm:$0xff]
        %v551 = vld [vmem:[#allocation5 + $0x838] sm:$0xff]
        %v552 = vld [vmem:[#allocation5 + $0x840] sm:$0xff]
        %v553 = vld [vmem:[#allocation5 + $0x848] sm:$0xff]
        %v554 = vld [vmem:[#allocation5 + $0x850] sm:$0xff]
        %v555 = vld [vmem:[#allocation5 + $0x858] sm:$0xff]
        %v556 = vld [vmem:[#allocation5 + $0x860] sm:$0xff]
        %v557 = vld [vmem:[#allocation5 + $0x868] sm:$0xff]
        %v558 = vld [vmem:[#allocation5 + $0x870] sm:$0xff]
        %v559 = vld [vmem:[#allocation5 + $0x878] sm:$0xff]
        %v560 = vld [vmem:[#allocation5 + $0x880] sm:$0xff]
        %v561 = vld [vmem:[#allocation5 + $0x888] sm:$0xff]
        %v562 = vld [vmem:[#allocation5 + $0x890] sm:$0xff]
        %v563 = vld [vmem:[#allocation5 + $0x898] sm:$0xff]
        %v564 = vld [vmem:[#allocation5 + $0x8a0] sm:$0xff]
        %v565 = vld [vmem:[#allocation5 + $0x8a8] sm:$0xff]
        %v566 = vld [vmem:[#allocation5 + $0x8b0] sm:$0xff]
        %v567 = vld [vmem:[#allocation5 + $0x8b8] sm:$0xff]
        %v568 = vld [vmem:[#allocation5 + $0x8c0] sm:$0xff]
        %v569 = vld [vmem:[#allocation5 + $0x8c8] sm:$0xff]
        %v570 = vld [vmem:[#allocation5 + $0x8d0] sm:$0xff]
        %v571 = vld [vmem:[#allocation5 + $0x8d8] sm:$0xff]
        %v572 = vld [vmem:[#allocation5 + $0x8e0] sm:$0xff]
        %v573 = vld [vmem:[#allocation5 + $0x8e8] sm:$0xff]
        %v574 = vld [vmem:[#allocation5 + $0x8f0] sm:$0xff]
        %v575 = vld [vmem:[#allocation5 + $0x8f8] sm:$0xff]
        %v576 = vld [vmem:[#allocation5 + $0x900] sm:$0xff]
        %v577 = vld [vmem:[#allocation5 + $0x908] sm:$0xff]
        %v578 = vld [vmem:[#allocation5 + $0x910] sm:$0xff]
        %v579 = vld [vmem:[#allocation5 + $0x918] sm:$0xff]
        %v580 = vld [vmem:[#allocation5 + $0x920] sm:$0xff]
        %v581 = vld [vmem:[#allocation5 + $0x928] sm:$0xff]
        %v582 = vld [vmem:[#allocation5 + $0x930] sm:$0xff]
        %v583 = vld [vmem:[#allocation5 + $0x938] sm:$0xff]
        %v584 = vld [vmem:[#allocation5 + $0x940] sm:$0xff]
        %v585 = vld [vmem:[#allocation5 + $0x948] sm:$0xff]
        %v586 = vld [vmem:[#allocation5 + $0x950] sm:$0xff]
        %v587 = vld [vmem:[#allocation5 + $0x958] sm:$0xff]
        %v588 = vld [vmem:[#allocation5 + $0x960] sm:$0xff]
        %v589 = vld [vmem:[#allocation5 + $0x968] sm:$0xff]
        %v590 = vld [vmem:[#allocation5 + $0x970] sm:$0xff]
        %v591 = vld [vmem:[#allocation5 + $0x978] sm:$0xff]
        %v592 = vld [vmem:[#allocation5 + $0x980] sm:$0xff]
        %v593 = vld [vmem:[#allocation5 + $0x988] sm:$0xff]
        %v594 = vld [vmem:[#allocation5 + $0x990] sm:$0xff]
        %v595 = vld [vmem:[#allocation5 + $0x998] sm:$0xff]
        %v596 = vld [vmem:[#allocation5 + $0x9a0] sm:$0xff]
        %v597 = vld [vmem:[#allocation5 + $0x9a8] sm:$0xff]
        %v598 = vld [vmem:[#allocation5 + $0x9b0] sm:$0xff]
        %v599 = vld [vmem:[#allocation5 + $0x9b8] sm:$0xff]
        %v600 = vld [vmem:[#allocation5 + $0x9c0] sm:$0xff]
        %v601 = vld [vmem:[#allocation5 + $0x9c8] sm:$0xff]
        %v602 = vld [vmem:[#allocation5 + $0x9d0] sm:$0xff]
        %v603 = vld [vmem:[#allocation5 + $0x9d8] sm:$0xff]
        %v604 = vld [vmem:[#allocation5 + $0x9e0] sm:$0xff]
        %v605 = vld [vmem:[#allocation5 + $0x9e8] sm:$0xff]
        %v606 = vld [vmem:[#allocation5 + $0x9f0] sm:$0xff]
        %v607 = vld [vmem:[#allocation5 + $0x9f8] sm:$0xff]
        %v608 = vld [vmem:[#allocation5 + $0xa00] sm:$0xff]
        %v609 = vld [vmem:[#allocation5 + $0xa08] sm:$0xff]
        %v610 = vld [vmem:[#allocation5 + $0xa10] sm:$0xff]
        %v611 = vld [vmem:[#allocation5 + $0xa18] sm:$0xff]
        %v612 = vld [vmem:[#allocation5 + $0xa20] sm:$0xff]
        %v613 = vld [vmem:[#allocation5 + $0xa28] sm:$0xff]
        %v614 = vld [vmem:[#allocation5 + $0xa30] sm:$0xff]
        %v615 = vld [vmem:[#allocation5 + $0xa38] sm:$0xff]
        %v616 = vld [vmem:[#allocation5 + $0xa40] sm:$0xff]
        %v617 = vld [vmem:[#allocation5 + $0xa48] sm:$0xff]
        %v618 = vld [vmem:[#allocation5 + $0xa50] sm:$0xff]
        %v619 = vld [vmem:[#allocation5 + $0xa58] sm:$0xff]
        %v620 = vld [vmem:[#allocation5 + $0xa60] sm:$0xff]
        %v621 = vld [vmem:[#allocation5 + $0xa68] sm:$0xff]
        %v622 = vld [vmem:[#allocation5 + $0xa70] sm:$0xff]
        %v623 = vld [vmem:[#allocation5 + $0xa78] sm:$0xff]
        %v624 = vld [vmem:[#allocation5 + $0xa80] sm:$0xff]
        %v625 = vld [vmem:[#allocation5 + $0xa88] sm:$0xff]
        %v626 = vld [vmem:[#allocation5 + $0xa90] sm:$0xff]
        %v627 = vld [vmem:[#allocation5 + $0xa98] sm:$0xff]
        %v628 = vld [vmem:[#allocation5 + $0xaa0] sm:$0xff]
        %v629 = vld [vmem:[#allocation5 + $0xaa8] sm:$0xff]
        %v630 = vld [vmem:[#allocation5 + $0xab0] sm:$0xff]
        %v631 = vld [vmem:[#allocation5 + $0xab8] sm:$0xff]
        %v632 = vld [vmem:[#allocation5 + $0xac0] sm:$0xff]
        %v633 = vld [vmem:[#allocation5 + $0xac8] sm:$0xff]
        %v634 = vld [vmem:[#allocation5 + $0xad0] sm:$0xff]
        %v635 = vld [vmem:[#allocation5 + $0xad8] sm:$0xff]
        %v636 = vld [vmem:[#allocation5 + $0xae0] sm:$0xff]
        %v637 = vld [vmem:[#allocation5 + $0xae8] sm:$0xff]
        %v638 = vld [vmem:[#allocation5 + $0xaf0] sm:$0xff]
        %v639 = vld [vmem:[#allocation5 + $0xaf8] sm:$0xff]
        %v640 = vld [vmem:[#allocation5 + $0xb00] sm:$0xff]
        %v641 = vld [vmem:[#allocation5 + $0xb08] sm:$0xff]
        %v642 = vld [vmem:[#allocation5 + $0xb10] sm:$0xff]
        %v643 = vld [vmem:[#allocation5 + $0xb18] sm:$0xff]
        %v644 = vld [vmem:[#allocation5 + $0xb20] sm:$0xff]
        %v645 = vld [vmem:[#allocation5 + $0xb28] sm:$0xff]
        %v646 = vld [vmem:[#allocation5 + $0xb30] sm:$0xff]
        %v647 = vld [vmem:[#allocation5 + $0xb38] sm:$0xff]
        %v648 = vld [vmem:[#allocation5 + $0xb40] sm:$0xff]
        %v649 = vld [vmem:[#allocation5 + $0xb48] sm:$0xff]
        %v650 = vld [vmem:[#allocation5 + $0xb50] sm:$0xff]
        %v651 = vld [vmem:[#allocation5 + $0xb58] sm:$0xff]
        %v652 = vld [vmem:[#allocation5 + $0xb60] sm:$0xff]
        %v653 = vld [vmem:[#allocation5 + $0xb68] sm:$0xff]
        %v654 = vld [vmem:[#allocation5 + $0xb70] sm:$0xff]
        %v655 = vld [vmem:[#allocation5 + $0xb78] sm:$0xff]
        %v656 = vld [vmem:[#allocation5 + $0xb80] sm:$0xff]
        %v657 = vld [vmem:[#allocation5 + $0xb88] sm:$0xff]
        %v658 = vld [vmem:[#allocation5 + $0xb90] sm:$0xff]
        %v659 = vld [vmem:[#allocation5 + $0xb98] sm:$0xff]
        %v660 = vld [vmem:[#allocation5 + $0xba0] sm:$0xff]
        %v661 = vld [vmem:[#allocation5 + $0xba8] sm:$0xff]
        %v662 = vld [vmem:[#allocation5 + $0xbb0] sm:$0xff]
        %v663 = vld [vmem:[#allocation5 + $0xbb8] sm:$0xff]
        %v664 = vld [vmem:[#allocation5 + $0xbc0] sm:$0xff]
        %v665 = vld [vmem:[#allocation5 + $0xbc8] sm:$0xff]
        %v666 = vld [vmem:[#allocation5 + $0xbd0] sm:$0xff]
        %v667 = vld [vmem:[#allocation5 + $0xbd8] sm:$0xff]
        %v668 = vld [vmem:[#allocation5 + $0xbe0] sm:$0xff]
        %v669 = vld [vmem:[#allocation5 + $0xbe8] sm:$0xff]
        %v670 = vld [vmem:[#allocation5 + $0xbf0] sm:$0xff]
        %v671 = vld [vmem:[#allocation5 + $0xbf8] sm:$0xff]
        %v672 = vld [vmem:[#allocation5 + $0xc00] sm:$0xff]
        %v673 = vld [vmem:[#allocation5 + $0xc08] sm:$0xff]
        %v674 = vld [vmem:[#allocation5 + $0xc10] sm:$0xff]
        %v675 = vld [vmem:[#allocation5 + $0xc18] sm:$0xff]
        %v676 = vld [vmem:[#allocation5 + $0xc20] sm:$0xff]
        %v677 = vld [vmem:[#allocation5 + $0xc28] sm:$0xff]
        %v678 = vld [vmem:[#allocation5 + $0xc30] sm:$0xff]
        %v679 = vld [vmem:[#allocation5 + $0xc38] sm:$0xff]
        %v680 = vld [vmem:[#allocation5 + $0xc40] sm:$0xff]
        %v681 = vld [vmem:[#allocation5 + $0xc48] sm:$0xff]
        %v682 = vld [vmem:[#allocation5 + $0xc50] sm:$0xff]
        %v683 = vld [vmem:[#allocation5 + $0xc58] sm:$0xff]
        %v684 = vld [vmem:[#allocation5 + $0xc60] sm:$0xff]
        %v685 = vld [vmem:[#allocation5 + $0xc68] sm:$0xff]
        %v686 = vld [vmem:[#allocation5 + $0xc70] sm:$0xff]
        %v687 = vld [vmem:[#allocation5 + $0xc78] sm:$0xff]
        %v688 = vld [vmem:[#allocation5 + $0xc80] sm:$0xff]
        %v689 = vld [vmem:[#allocation5 + $0xc88] sm:$0xff]
        %v690 = vld [vmem:[#allocation5 + $0xc90] sm:$0xff]
        %v691 = vld [vmem:[#allocation5 + $0xc98] sm:$0xff]
        %v692 = vld [vmem:[#allocation5 + $0xca0] sm:$0xff]
        %v693 = vld [vmem:[#allocation5 + $0xca8] sm:$0xff]
        %v694 = vld [vmem:[#allocation5 + $0xcb0] sm:$0xff]
        %v695 = vld [vmem:[#allocation5 + $0xcb8] sm:$0xff]
        %v696 = vld [vmem:[#allocation5 + $0xcc0] sm:$0xff]
        %v697 = vld [vmem:[#allocation5 + $0xcc8] sm:$0xff]
        %v698 = vld [vmem:[#allocation5 + $0xcd0] sm:$0xff]
        %v699 = vld [vmem:[#allocation5 + $0xcd8] sm:$0xff]
        %v700 = vld [vmem:[#allocation5 + $0xce0] sm:$0xff]
        %v701 = vld [vmem:[#allocation5 + $0xce8] sm:$0xff]
        %v702 = vld [vmem:[#allocation5 + $0xcf0] sm:$0xff]
        %v703 = vld [vmem:[#allocation5 + $0xcf8] sm:$0xff]
        %v704 = vld [vmem:[#allocation5 + $0xd00] sm:$0xff]
        %v705 = vld [vmem:[#allocation5 + $0xd08] sm:$0xff]
        %v706 = vld [vmem:[#allocation5 + $0xd10] sm:$0xff]
        %v707 = vld [vmem:[#allocation5 + $0xd18] sm:$0xff]
        %v708 = vld [vmem:[#allocation5 + $0xd20] sm:$0xff]
        %v709 = vld [vmem:[#allocation5 + $0xd28] sm:$0xff]
        %v710 = vld [vmem:[#allocation5 + $0xd30] sm:$0xff]
        %v711 = vld [vmem:[#allocation5 + $0xd38] sm:$0xff]
        %v712 = vld [vmem:[#allocation5 + $0xd40] sm:$0xff]
        %v713 = vld [vmem:[#allocation5 + $0xd48] sm:$0xff]
        %v714 = vld [vmem:[#allocation5 + $0xd50] sm:$0xff]
        %v715 = vld [vmem:[#allocation5 + $0xd58] sm:$0xff]
        %v716 = vld [vmem:[#allocation5 + $0xd60] sm:$0xff]
        %v717 = vld [vmem:[#allocation5 + $0xd68] sm:$0xff]
        %v718 = vld [vmem:[#allocation5 + $0xd70] sm:$0xff]
        %v719 = vld [vmem:[#allocation5 + $0xd78] sm:$0xff]
        %v720 = vld [vmem:[#allocation5 + $0xd80] sm:$0xff]
        %v721 = vld [vmem:[#allocation5 + $0xd88] sm:$0xff]
        %v722 = vld [vmem:[#allocation5 + $0xd90] sm:$0xff]
        %v723 = vld [vmem:[#allocation5 + $0xd98] sm:$0xff]
        %v724 = vld [vmem:[#allocation5 + $0xda0] sm:$0xff]
        %v725 = vld [vmem:[#allocation5 + $0xda8] sm:$0xff]
        %v726 = vld [vmem:[#allocation5 + $0xdb0] sm:$0xff]
        %v727 = vld [vmem:[#allocation5 + $0xdb8] sm:$0xff]
        %v728 = vld [vmem:[#allocation5 + $0xdc0] sm:$0xff]
        %v729 = vld [vmem:[#allocation5 + $0xdc8] sm:$0xff]
        %v730 = vld [vmem:[#allocation5 + $0xdd0] sm:$0xff]
        %v731 = vld [vmem:[#allocation5 + $0xdd8] sm:$0xff]
        %v732 = vld [vmem:[#allocation5 + $0xde0] sm:$0xff]
        %v733 = vld [vmem:[#allocation5 + $0xde8] sm:$0xff]
        %v734 = vld [vmem:[#allocation5 + $0xdf0] sm:$0xff]
        %v735 = vld [vmem:[#allocation5 + $0xdf8] sm:$0xff]
        %v736 = vld [vmem:[#allocation5 + $0xe00] sm:$0xff]
        %v737 = vld [vmem:[#allocation5 + $0xe08] sm:$0xff]
        %v738 = vld [vmem:[#allocation5 + $0xe10] sm:$0xff]
        %v739 = vld [vmem:[#allocation5 + $0xe18] sm:$0xff]
        %v740 = vld [vmem:[#allocation5 + $0xe20] sm:$0xff]
        %v741 = vld [vmem:[#allocation5 + $0xe28] sm:$0xff]
        %v742 = vld [vmem:[#allocation5 + $0xe30] sm:$0xff]
        %v743 = vld [vmem:[#allocation5 + $0xe38] sm:$0xff]
        %v744 = vld [vmem:[#allocation5 + $0xe40] sm:$0xff]
        %v745 = vld [vmem:[#allocation5 + $0xe48] sm:$0xff]
        %v746 = vld [vmem:[#allocation5 + $0xe50] sm:$0xff]
        %v747 = vld [vmem:[#allocation5 + $0xe58] sm:$0xff]
        %v748 = vld [vmem:[#allocation5 + $0xe60] sm:$0xff]
        %v749 = vld [vmem:[#allocation5 + $0xe68] sm:$0xff]
        %v750 = vld [vmem:[#allocation5 + $0xe70] sm:$0xff]
        %v751 = vld [vmem:[#allocation5 + $0xe78] sm:$0xff]
        %v752 = vld [vmem:[#allocation5 + $0xe80] sm:$0xff]
        %v753 = vld [vmem:[#allocation5 + $0xe88] sm:$0xff]
        %v754 = vld [vmem:[#allocation5 + $0xe90] sm:$0xff]
        %v755 = vld [vmem:[#allocation5 + $0xe98] sm:$0xff]
        %v756 = vld [vmem:[#allocation5 + $0xea0] sm:$0xff]
        %v757 = vld [vmem:[#allocation5 + $0xea8] sm:$0xff]
        %v758 = vld [vmem:[#allocation5 + $0xeb0] sm:$0xff]
        %v759 = vld [vmem:[#allocation5 + $0xeb8] sm:$0xff]
        %v760 = vld [vmem:[#allocation5 + $0xec0] sm:$0xff]
        %v761 = vld [vmem:[#allocation5 + $0xec8] sm:$0xff]
        %v762 = vld [vmem:[#allocation5 + $0xed0] sm:$0xff]
        %v763 = vld [vmem:[#allocation5 + $0xed8] sm:$0xff]
        %v764 = vld [vmem:[#allocation5 + $0xee0] sm:$0xff]
        %v765 = vld [vmem:[#allocation5 + $0xee8] sm:$0xff]
        %v766 = vld [vmem:[#allocation5 + $0xef0] sm:$0xff]
        %v767 = vld [vmem:[#allocation5 + $0xef8] sm:$0xff]
        %v768 = vld [vmem:[#allocation5 + $0xf00] sm:$0xff]
        %v769 = vld [vmem:[#allocation5 + $0xf08] sm:$0xff]
        %v770 = vld [vmem:[#allocation5 + $0xf10] sm:$0xff]
        %v771 = vld [vmem:[#allocation5 + $0xf18] sm:$0xff]
        %v772 = vld [vmem:[#allocation5 + $0xf20] sm:$0xff]
        %v773 = vld [vmem:[#allocation5 + $0xf28] sm:$0xff]
        %v774 = vld [vmem:[#allocation5 + $0xf30] sm:$0xff]
        %v775 = vld [vmem:[#allocation5 + $0xf38] sm:$0xff]
        %v776 = vld [vmem:[#allocation5 + $0xf40] sm:$0xff]
        %v777 = vld [vmem:[#allocation5 + $0xf48] sm:$0xff]
        %v778 = vld [vmem:[#allocation5 + $0xf50] sm:$0xff]
        %v779 = vld [vmem:[#allocation5 + $0xf58] sm:$0xff]
        %v780 = vld [vmem:[#allocation5 + $0xf60] sm:$0xff]
        %v781 = vld [vmem:[#allocation5 + $0xf68] sm:$0xff]
        %v782 = vld [vmem:[#allocation5 + $0xf70] sm:$0xff]
        %v783 = vld [vmem:[#allocation5 + $0xf78] sm:$0xff]
        %v784 = vld [vmem:[#allocation5 + $0xf80] sm:$0xff]
        %v785 = vld [vmem:[#allocation5 + $0xf88] sm:$0xff]
        %v786 = vld [vmem:[#allocation5 + $0xf90] sm:$0xff]
        %v787 = vld [vmem:[#allocation5 + $0xf98] sm:$0xff]
        %v788 = vld [vmem:[#allocation5 + $0xfa0] sm:$0xff]
        %v789 = vld [vmem:[#allocation5 + $0xfa8] sm:$0xff]
        %v790 = vld [vmem:[#allocation5 + $0xfb0] sm:$0xff]
        %v791 = vld [vmem:[#allocation5 + $0xfb8] sm:$0xff]
        %v792 = vld [vmem:[#allocation5 + $0xfc0] sm:$0xff]
        %v793 = vld [vmem:[#allocation5 + $0xfc8] sm:$0xff]
        %v794 = vld [vmem:[#allocation5 + $0xfd0] sm:$0xff]
        %v795 = vld [vmem:[#allocation5 + $0xfd8] sm:$0xff]
        %v796 = vld [vmem:[#allocation5 + $0xfe0] sm:$0xff]
        %v797 = vld [vmem:[#allocation5 + $0xfe8] sm:$0xff]
        %v798 = vld [vmem:[#allocation5 + $0xff0] sm:$0xff]
        %v799 = vld [vmem:[#allocation5 + $0xff8] sm:$0xff]
        %v800 = vld [vmem:[#allocation5 + $0x1000] sm:$0xff]
        %v801 = vld [vmem:[#allocation5 + $0x1008] sm:$0xff]
        %v802 = vld [vmem:[#allocation5 + $0x1010] sm:$0xff]
        %v803 = vld [vmem:[#allocation5 + $0x1018] sm:$0xff]
        %v804 = vld [vmem:[#allocation5 + $0x1020] sm:$0xff]
        %v805 = vld [vmem:[#allocation5 + $0x1028] sm:$0xff]
        %v806 = vld [vmem:[#allocation5 + $0x1030] sm:$0xff]
        %v807 = vld [vmem:[#allocation5 + $0x1038] sm:$0xff]
        %v808 = vld [vmem:[#allocation5 + $0x1040] sm:$0xff]
        %v809 = vld [vmem:[#allocation5 + $0x1048] sm:$0xff]
        %v810 = vld [vmem:[#allocation5 + $0x1050] sm:$0xff]
        %v811 = vld [vmem:[#allocation5 + $0x1058] sm:$0xff]
        %v812 = vld [vmem:[#allocation5 + $0x1060] sm:$0xff]
        %v813 = vld [vmem:[#allocation5 + $0x1068] sm:$0xff]
        %v814 = vld [vmem:[#allocation5 + $0x1070] sm:$0xff]
        %v815 = vld [vmem:[#allocation5 + $0x1078] sm:$0xff]
        %v816 = vld [vmem:[#allocation5 + $0x1080] sm:$0xff]
        %v817 = vld [vmem:[#allocation5 + $0x1088] sm:$0xff]
        %v818 = vld [vmem:[#allocation5 + $0x1090] sm:$0xff]
        %v819 = vld [vmem:[#allocation5 + $0x1098] sm:$0xff]
        %v820 = vld [vmem:[#allocation5 + $0x10a0] sm:$0xff]
        %v821 = vld [vmem:[#allocation5 + $0x10a8] sm:$0xff]
        %v822 = vld [vmem:[#allocation5 + $0x10b0] sm:$0xff]
        %v823 = vld [vmem:[#allocation5 + $0x10b8] sm:$0xff]
        %v824 = vld [vmem:[#allocation5 + $0x10c0] sm:$0xff]
        %v825 = vld [vmem:[#allocation5 + $0x10c8] sm:$0xff]
        %v826 = vld [vmem:[#allocation5 + $0x10d0] sm:$0xff]
        %v827 = vld [vmem:[#allocation5 + $0x10d8] sm:$0xff]
        %v828 = vld [vmem:[#allocation5 + $0x10e0] sm:$0xff]
        %v829 = vld [vmem:[#allocation5 + $0x10e8] sm:$0xff]
        %v830 = vld [vmem:[#allocation5 + $0x10f0] sm:$0xff]
        %v831 = vld [vmem:[#allocation5 + $0x10f8] sm:$0xff]
        %v832 = vld [vmem:[#allocation5 + $0x1100] sm:$0xff]
        %v833 = vld [vmem:[#allocation5 + $0x1108] sm:$0xff]
        %v834 = vld [vmem:[#allocation5 + $0x1110] sm:$0xff]
        %v835 = vld [vmem:[#allocation5 + $0x1118] sm:$0xff]
        %v836 = vld [vmem:[#allocation5 + $0x1120] sm:$0xff]
        %v837 = vld [vmem:[#allocation5 + $0x1128] sm:$0xff]
        %v838 = vld [vmem:[#allocation5 + $0x1130] sm:$0xff]
        %v839 = vld [vmem:[#allocation5 + $0x1138] sm:$0xff]
        %v840 = vld [vmem:[#allocation5 + $0x1140] sm:$0xff]
        %v841 = vld [vmem:[#allocation5 + $0x1148] sm:$0xff]
        %v842 = vld [vmem:[#allocation5 + $0x1150] sm:$0xff]
        %v843 = vld [vmem:[#allocation5 + $0x1158] sm:$0xff]
        %v844 = vld [vmem:[#allocation5 + $0x1160] sm:$0xff]
        %v845 = vld [vmem:[#allocation5 + $0x1168] sm:$0xff]
        %v846 = vld [vmem:[#allocation5 + $0x1170] sm:$0xff]
        %v847 = vld [vmem:[#allocation5 + $0x1178] sm:$0xff]
        %v848 = vld [vmem:[#allocation5 + $0x1180] sm:$0xff]
        %v849 = vld [vmem:[#allocation5 + $0x1188] sm:$0xff]
        %v850 = vld [vmem:[#allocation5 + $0x1190] sm:$0xff]
        %v851 = vld [vmem:[#allocation5 + $0x1198] sm:$0xff]
        %v852 = vld [vmem:[#allocation5 + $0x11a0] sm:$0xff]
        %v853 = vld [vmem:[#allocation5 + $0x11a8] sm:$0xff]
        %v854 = vld [vmem:[#allocation5 + $0x11b0] sm:$0xff]
        %v855 = vld [vmem:[#allocation5 + $0x11b8] sm:$0xff]
        %v856 = vld [vmem:[#allocation5 + $0x11c0] sm:$0xff]
        %v857 = vld [vmem:[#allocation5 + $0x11c8] sm:$0xff]
        %v858 = vld [vmem:[#allocation5 + $0x11d0] sm:$0xff]
        %v859 = vld [vmem:[#allocation5 + $0x11d8] sm:$0xff]
        %v860 = vld [vmem:[#allocation5 + $0x11e0] sm:$0xff]
        %v861 = vld [vmem:[#allocation5 + $0x11e8] sm:$0xff]
        %v862 = vld [vmem:[#allocation5 + $0x11f0] sm:$0xff]
        %v863 = vld [vmem:[#allocation5 + $0x11f8] sm:$0xff]
        %v864 = vld [vmem:[#allocation7] sm:$0x3f]
        %v866 = vlaneseq
        %v867 = vshrl.u32 %v866, 7
        %v868 = vsub.s32 0, %v867
        %v869 = vrot.slane %v864, %v868
        %v870 = vlaneseq
        %v871 = vshrl.u32 %v870, 7
        %v872 = vsub.s32 1, %v871
        %v873 = vrot.slane %v864, %v872
        %v874 = vlaneseq
        %v875 = vshrl.u32 %v874, 7
        %v876 = vsub.s32 2, %v875
        %v877 = vrot.slane %v864, %v876
        %v878 = vlaneseq
        %v879 = vshrl.u32 %v878, 7
        %v880 = vsub.s32 3, %v879
        %v881 = vrot.slane %v864, %v880
        %v882 = vlaneseq
        %v883 = vshrl.u32 %v882, 7
        %v884 = vsub.s32 4, %v883
        %v885 = vrot.slane %v864, %v884
        %v886 = vlaneseq
        %v887 = vshrl.u32 %v886, 7
        %v888 = vsub.s32 5, %v887
        %v889 = vrot.slane %v864, %v888
        %896 = vmatprep.subr.mxu0 %v379
        %897 = vmatpush1.msra.mxu0 %v378
        %898 = vmatprep.subr.mxu0 %v373
        %899 = vmatpush1.msra.mxu0 %v372
        %900 = vmatprep.subr.mxu0 %v367
        %901 = vmatpush1.msra.mxu0 %v366
        %902 = vmatprep.subr.mxu0 %v361
        %903 = vmatpush1.msra.mxu0 %v360
        %904 = vmatprep.subr.mxu0 %v355
        %905 = vmatpush1.msra.mxu0 %v354
        %906 = vmatprep.subr.mxu0 %v349
        %907 = vmatpush1.msra.mxu0 %v348
        %908 = vmatprep.subr.mxu0 %v343
        %909 = vmatpush1.msra.mxu0 %v342
        %910 = vmatprep.subr.mxu0 %v337
        %911 = vmatpush1.msra.mxu0 %v336
        %912 = vmatprep.subr.mxu0 %v331
        %913 = vmatpush1.msra.mxu0 %v330
        %914 = vmatprep.subr.mxu0 %v325
        %915 = vmatpush1.msra.mxu0 %v324
        %916 = vmatprep.subr.mxu0 %v319
        %917 = vmatpush1.msra.mxu0 %v318
        %918 = vmatprep.subr.mxu0 %v313
        %919 = vmatpush1.msra.mxu0 %v312
        %920 = vmatprep.subr.mxu0 %v307
        %921 = vmatpush1.msra.mxu0 %v306
        %922 = vmatprep.subr.mxu0 %v301
        %923 = vmatpush1.msra.mxu0 %v300
        %924 = vmatprep.subr.mxu0 %v295
        %925 = vmatpush1.msra.mxu0 %v294
        %926 = vmatprep.subr.mxu0 %v289
        %927 = vmatpush1.msra.mxu0 %v288
        %928 = vmatprep.subr.mxu0 %v475
        %929 = vmatpush2.msra.mxu0 %v474
        %930 = vmatprep.subr.mxu0 %v469
        %931 = vmatpush2.msra.mxu0 %v468
        %932 = vmatprep.subr.mxu0 %v463
        %933 = vmatpush2.msra.mxu0 %v462
        %934 = vmatprep.subr.mxu0 %v457
        %935 = vmatpush2.msra.mxu0 %v456
        %936 = vmatprep.subr.mxu0 %v451
        %937 = vmatpush2.msra.mxu0 %v450
        %938 = vmatprep.subr.mxu0 %v445
        %939 = vmatpush2.msra.mxu0 %v444
        %940 = vmatprep.subr.mxu0 %v439
        %941 = vmatpush2.msra.mxu0 %v438
        %942 = vmatprep.subr.mxu0 %v433
        %943 = vmatpush2.msra.mxu0 %v432
        %944 = vmatprep.subr.mxu0 %v427
        %945 = vmatpush2.msra.mxu0 %v426
        %946 = vmatprep.subr.mxu0 %v421
        %947 = vmatpush2.msra.mxu0 %v420
        %948 = vmatprep.subr.mxu0 %v415
        %949 = vmatpush2.msra.mxu0 %v414
        %950 = vmatprep.subr.mxu0 %v409
        %951 = vmatpush2.msra.mxu0 %v408
        %952 = vmatprep.subr.mxu0 %v403
        %953 = vmatpush2.msra.mxu0 %v402
        %954 = vmatprep.subr.mxu0 %v397
        %955 = vmatpush2.msra.mxu0 %v396
        %956 = vmatprep.subr.mxu0 %v391
        %957 = vmatpush2.msra.mxu0 %v390
        %958 = vmatprep.subr.mxu0 %v385
        %959 = vmatpush2.msra.mxu0 %v384
        %960 = vmatprep.mubr.f32.mxu0 %v283
        %961 = vmatmul.mubr.f32.gmra.mxu0 %v282
        %v962 = vpop.f32.mrf.mxu0
        %v963 = vadd.f32 %v869, %v962
        %v964 = vpop.f32.mrf.mxu0
        %v965 = vadd.f32 %v873, %v964
        %966 = vdwg.mxu0
        %967 = vmatprep.subr.mxu0 %v571
        %968 = vmatpush1.msra.mxu0 %v570
        %969 = vmatprep.subr.mxu0 %v565
        %970 = vmatpush1.msra.mxu0 %v564
        %971 = vmatprep.subr.mxu0 %v559
        %972 = vmatpush1.msra.mxu0 %v558
        %973 = vmatprep.subr.mxu0 %v553
        %974 = vmatpush1.msra.mxu0 %v552
        %975 = vmatprep.subr.mxu0 %v547
        %976 = vmatpush1.msra.mxu0 %v546
        %977 = vmatprep.subr.mxu0 %v541
        %978 = vmatpush1.msra.mxu0 %v540
        %979 = vmatprep.subr.mxu0 %v535
        %980 = vmatpush1.msra.mxu0 %v534
        %981 = vmatprep.subr.mxu0 %v529
        %982 = vmatpush1.msra.mxu0 %v528
        %983 = vmatprep.subr.mxu0 %v523
        %984 = vmatpush1.msra.mxu0 %v522
        %985 = vmatprep.subr.mxu0 %v517
        %986 = vmatpush1.msra.mxu0 %v516
        %987 = vmatprep.subr.mxu0 %v511
        %988 = vmatpush1.msra.mxu0 %v510
        %989 = vmatprep.subr.mxu0 %v505
        %990 = vmatpush1.msra.mxu0 %v504
        %991 = vmatprep.subr.mxu0 %v499
        %992 = vmatpush1.msra.mxu0 %v498
        %993 = vmatprep.subr.mxu0 %v493
        %994 = vmatpush1.msra.mxu0 %v492
        %995 = vmatprep.subr.mxu0 %v487
        %996 = vmatpush1.msra.mxu0 %v486
        %997 = vmatprep.subr.mxu0 %v481
        %998 = vmatpush1.msra.mxu0 %v480
        %999 = vmatprep.subr.mxu0 %v667
        %1000 = vmatpush2.msra.mxu0 %v666
        %1001 = vmatprep.subr.mxu0 %v661
        %1002 = vmatpush2.msra.mxu0 %v660
        %1003 = vmatprep.subr.mxu0 %v655
        %1004 = vmatpush2.msra.mxu0 %v654
        %1005 = vmatprep.subr.mxu0 %v649
        %1006 = vmatpush2.msra.mxu0 %v648
        %1007 = vmatprep.subr.mxu0 %v643
        %1008 = vmatpush2.msra.mxu0 %v642
        %1009 = vmatprep.subr.mxu0 %v637
        %1010 = vmatpush2.msra.mxu0 %v636
        %1011 = vmatprep.subr.mxu0 %v631
        %1012 = vmatpush2.msra.mxu0 %v630
        %1013 = vmatprep.subr.mxu0 %v625
        %1014 = vmatpush2.msra.mxu0 %v624
        %1015 = vmatprep.subr.mxu0 %v619
        %1016 = vmatpush2.msra.mxu0 %v618
        %1017 = vmatprep.subr.mxu0 %v613
        %1018 = vmatpush2.msra.mxu0 %v612
        %1019 = vmatprep.subr.mxu0 %v607
        %1020 = vmatpush2.msra.mxu0 %v606
        %1021 = vmatprep.subr.mxu0 %v601
        %1022 = vmatpush2.msra.mxu0 %v600
        %1023 = vmatprep.subr.mxu0 %v595
        %1024 = vmatpush2.msra.mxu0 %v594
        %1025 = vmatprep.subr.mxu0 %v589
        %1026 = vmatpush2.msra.mxu0 %v588
        %1027 = vmatprep.subr.mxu0 %v583
        %1028 = vmatpush2.msra.mxu0 %v582
        %1029 = vmatprep.subr.mxu0 %v577
        %1030 = vmatpush2.msra.mxu0 %v576
        %1031 = vmatprep.mubr.f32.mxu0 %v285
        %1032 = vmatmul.mubr.f32.gmra.mxu0 %v284
        %v1033 = vpop.f32.mrf.mxu0
        %v1034 = vadd.f32 %v963, %v1033
        %v1035 = vpop.f32.mrf.mxu0
        %v1036 = vadd.f32 %v965, %v1035
        %1037 = vdwg.mxu0
        %1038 = vmatprep.subr.mxu0 %v763
        %1039 = vmatpush1.msra.mxu0 %v762
        %1040 = vmatprep.subr.mxu0 %v757
        %1041 = vmatpush1.msra.mxu0 %v756
        %1042 = vmatprep.subr.mxu0 %v751
        %1043 = vmatpush1.msra.mxu0 %v750
        %1044 = vmatprep.subr.mxu0 %v745
        %1045 = vmatpush1.msra.mxu0 %v744
        %1046 = vmatprep.subr.mxu0 %v739
        %1047 = vmatpush1.msra.mxu0 %v738
        %1048 = vmatprep.subr.mxu0 %v733
        %1049 = vmatpush1.msra.mxu0 %v732
        %1050 = vmatprep.subr.mxu0 %v727
        %1051 = vmatpush1.msra.mxu0 %v726
        %1052 = vmatprep.subr.mxu0 %v721
        %1053 = vmatpush1.msra.mxu0 %v720
        %1054 = vmatprep.subr.mxu0 %v715
        %1055 = vmatpush1.msra.mxu0 %v714
        %1056 = vmatprep.subr.mxu0 %v709
        %1057 = vmatpush1.msra.mxu0 %v708
        %1058 = vmatprep.subr.mxu0 %v703
        %1059 = vmatpush1.msra.mxu0 %v702
        %1060 = vmatprep.subr.mxu0 %v697
        %1061 = vmatpush1.msra.mxu0 %v696
        %1062 = vmatprep.subr.mxu0 %v691
        %1063 = vmatpush1.msra.mxu0 %v690
        %1064 = vmatprep.subr.mxu0 %v685
        %1065 = vmatpush1.msra.mxu0 %v684
        %1066 = vmatprep.subr.mxu0 %v679
        %1067 = vmatpush1.msra.mxu0 %v678
        %1068 = vmatprep.subr.mxu0 %v673
        %1069 = vmatpush1.msra.mxu0 %v672
        %1070 = vmatprep.subr.mxu0 %v859
        %1071 = vmatpush2.msra.mxu0 %v858
        %1072 = vmatprep.subr.mxu0 %v853
        %1073 = vmatpush2.msra.mxu0 %v852
        %1074 = vmatprep.subr.mxu0 %v847
        %1075 = vmatpush2.msra.mxu0 %v846
        %1076 = vmatprep.subr.mxu0 %v841
        %1077 = vmatpush2.msra.mxu0 %v840
        %1078 = vmatprep.subr.mxu0 %v835
        %1079 = vmatpush2.msra.mxu0 %v834
        %1080 = vmatprep.subr.mxu0 %v829
        %1081 = vmatpush2.msra.mxu0 %v828
        %1082 = vmatprep.subr.mxu0 %v823
        %1083 = vmatpush2.msra.mxu0 %v822
        %1084 = vmatprep.subr.mxu0 %v817
        %1085 = vmatpush2.msra.mxu0 %v816
        %1086 = vmatprep.subr.mxu0 %v811
        %1087 = vmatpush2.msra.mxu0 %v810
        %1088 = vmatprep.subr.mxu0 %v805
        %1089 = vmatpush2.msra.mxu0 %v804
        %1090 = vmatprep.subr.mxu0 %v799
        %1091 = vmatpush2.msra.mxu0 %v798
        %1092 = vmatprep.subr.mxu0 %v793
        %1093 = vmatpush2.msra.mxu0 %v792
        %1094 = vmatprep.subr.mxu0 %v787
        %1095 = vmatpush2.msra.mxu0 %v786
        %1096 = vmatprep.subr.mxu0 %v781
        %1097 = vmatpush2.msra.mxu0 %v780
        %1098 = vmatprep.subr.mxu0 %v775
        %1099 = vmatpush2.msra.mxu0 %v774
        %1100 = vmatprep.subr.mxu0 %v769
        %1101 = vmatpush2.msra.mxu0 %v768
        %1102 = vmatprep.mubr.f32.mxu0 %v287
        %1103 = vmatmul.mubr.f32.gmra.mxu0 %v286
        %v1104 = vpop.f32.mrf.mxu0
        %v1105 = vadd.f32 %v1034, %v1104
        %v1106 = vpop.f32.mrf.mxu0
        %v1107 = vadd.f32 %v1036, %v1106
        %1108 = vdwg.mxu0
        %1109 = vmatprep.subr.mxu0 %v381
        %1110 = vmatpush1.msra.mxu0 %v380
        %1111 = vmatprep.subr.mxu0 %v375
        %1112 = vmatpush1.msra.mxu0 %v374
        %1113 = vmatprep.subr.mxu0 %v369
        %1114 = vmatpush1.msra.mxu0 %v368
        %1115 = vmatprep.subr.mxu0 %v363
        %1116 = vmatpush1.msra.mxu0 %v362
        %1117 = vmatprep.subr.mxu0 %v357
        %1118 = vmatpush1.msra.mxu0 %v356
        %1119 = vmatprep.subr.mxu0 %v351
        %1120 = vmatpush1.msra.mxu0 %v350
        %1121 = vmatprep.subr.mxu0 %v345
        %1122 = vmatpush1.msra.mxu0 %v344
        %1123 = vmatprep.subr.mxu0 %v339
        %1124 = vmatpush1.msra.mxu0 %v338
        %1125 = vmatprep.subr.mxu0 %v333
        %1126 = vmatpush1.msra.mxu0 %v332
        %1127 = vmatprep.subr.mxu0 %v327
        %1128 = vmatpush1.msra.mxu0 %v326
        %1129 = vmatprep.subr.mxu0 %v321
        %1130 = vmatpush1.msra.mxu0 %v320
        %1131 = vmatprep.subr.mxu0 %v315
        %1132 = vmatpush1.msra.mxu0 %v314
        %1133 = vmatprep.subr.mxu0 %v309
        %1134 = vmatpush1.msra.mxu0 %v308
        %1135 = vmatprep.subr.mxu0 %v303
        %1136 = vmatpush1.msra.mxu0 %v302
        %1137 = vmatprep.subr.mxu0 %v297
        %1138 = vmatpush1.msra.mxu0 %v296
        %1139 = vmatprep.subr.mxu0 %v291
        %1140 = vmatpush1.msra.mxu0 %v290
        %1141 = vmatprep.subr.mxu0 %v477
        %1142 = vmatpush2.msra.mxu0 %v476
        %1143 = vmatprep.subr.mxu0 %v471
        %1144 = vmatpush2.msra.mxu0 %v470
        %1145 = vmatprep.subr.mxu0 %v465
        %1146 = vmatpush2.msra.mxu0 %v464
        %1147 = vmatprep.subr.mxu0 %v459
        %1148 = vmatpush2.msra.mxu0 %v458
        %1149 = vmatprep.subr.mxu0 %v453
        %1150 = vmatpush2.msra.mxu0 %v452
        %1151 = vmatprep.subr.mxu0 %v447
        %1152 = vmatpush2.msra.mxu0 %v446
        %1153 = vmatprep.subr.mxu0 %v441
        %1154 = vmatpush2.msra.mxu0 %v440
        %1155 = vmatprep.subr.mxu0 %v435
        %1156 = vmatpush2.msra.mxu0 %v434
        %1157 = vmatprep.subr.mxu0 %v429
        %1158 = vmatpush2.msra.mxu0 %v428
        %1159 = vmatprep.subr.mxu0 %v423
        %1160 = vmatpush2.msra.mxu0 %v422
        %1161 = vmatprep.subr.mxu0 %v417
        %1162 = vmatpush2.msra.mxu0 %v416
        %1163 = vmatprep.subr.mxu0 %v411
        %1164 = vmatpush2.msra.mxu0 %v410
        %1165 = vmatprep.subr.mxu0 %v405
        %1166 = vmatpush2.msra.mxu0 %v404
        %1167 = vmatprep.subr.mxu0 %v399
        %1168 = vmatpush2.msra.mxu0 %v398
        %1169 = vmatprep.subr.mxu0 %v393
        %1170 = vmatpush2.msra.mxu0 %v392
        %1171 = vmatprep.subr.mxu0 %v387
        %1172 = vmatpush2.msra.mxu0 %v386
        %1173 = vmatprep.mubr.f32.mxu0 %v283
        %1174 = vmatmul.mubr.f32.gmra.mxu0 %v282
        %v1175 = vpop.f32.mrf.mxu0
        %v1176 = vadd.f32 %v877, %v1175
        %v1177 = vpop.f32.mrf.mxu0
        %v1178 = vadd.f32 %v881, %v1177
        %1179 = vdwg.mxu0
        %1180 = vmatprep.subr.mxu0 %v573
        %1181 = vmatpush1.msra.mxu0 %v572
        %1182 = vmatprep.subr.mxu0 %v567
        %1183 = vmatpush1.msra.mxu0 %v566
        %1184 = vmatprep.subr.mxu0 %v561
        %1185 = vmatpush1.msra.mxu0 %v560
        %1186 = vmatprep.subr.mxu0 %v555
        %1187 = vmatpush1.msra.mxu0 %v554
        %1188 = vmatprep.subr.mxu0 %v549
        %1189 = vmatpush1.msra.mxu0 %v548
        %1190 = vmatprep.subr.mxu0 %v543
        %1191 = vmatpush1.msra.mxu0 %v542
        %1192 = vmatprep.subr.mxu0 %v537
        %1193 = vmatpush1.msra.mxu0 %v536
        %1194 = vmatprep.subr.mxu0 %v531
        %1195 = vmatpush1.msra.mxu0 %v530
        %1196 = vmatprep.subr.mxu0 %v525
        %1197 = vmatpush1.msra.mxu0 %v524
        %1198 = vmatprep.subr.mxu0 %v519
        %1199 = vmatpush1.msra.mxu0 %v518
        %1200 = vmatprep.subr.mxu0 %v513
        %1201 = vmatpush1.msra.mxu0 %v512
        %1202 = vmatprep.subr.mxu0 %v507
        %1203 = vmatpush1.msra.mxu0 %v506
        %1204 = vmatprep.subr.mxu0 %v501
        %1205 = vmatpush1.msra.mxu0 %v500
        %1206 = vmatprep.subr.mxu0 %v495
        %1207 = vmatpush1.msra.mxu0 %v494
        %1208 = vmatprep.subr.mxu0 %v489
        %1209 = vmatpush1.msra.mxu0 %v488
        %1210 = vmatprep.subr.mxu0 %v483
        %1211 = vmatpush1.msra.mxu0 %v482
        %1212 = vmatprep.subr.mxu0 %v669
        %1213 = vmatpush2.msra.mxu0 %v668
        %1214 = vmatprep.subr.mxu0 %v663
        %1215 = vmatpush2.msra.mxu0 %v662
        %1216 = vmatprep.subr.mxu0 %v657
        %1217 = vmatpush2.msra.mxu0 %v656
        %1218 = vmatprep.subr.mxu0 %v651
        %1219 = vmatpush2.msra.mxu0 %v650
        %1220 = vmatprep.subr.mxu0 %v645
        %1221 = vmatpush2.msra.mxu0 %v644
        %1222 = vmatprep.subr.mxu0 %v639
        %1223 = vmatpush2.msra.mxu0 %v638
        %1224 = vmatprep.subr.mxu0 %v633
        %1225 = vmatpush2.msra.mxu0 %v632
        %1226 = vmatprep.subr.mxu0 %v627
        %1227 = vmatpush2.msra.mxu0 %v626
        %1228 = vmatprep.subr.mxu0 %v621
        %1229 = vmatpush2.msra.mxu0 %v620
        %1230 = vmatprep.subr.mxu0 %v615
        %1231 = vmatpush2.msra.mxu0 %v614
        %1232 = vmatprep.subr.mxu0 %v609
        %1233 = vmatpush2.msra.mxu0 %v608
        %1234 = vmatprep.subr.mxu0 %v603
        %1235 = vmatpush2.msra.mxu0 %v602
        %1236 = vmatprep.subr.mxu0 %v597
        %1237 = vmatpush2.msra.mxu0 %v596
        %1238 = vmatprep.subr.mxu0 %v591
        %1239 = vmatpush2.msra.mxu0 %v590
        %1240 = vmatprep.subr.mxu0 %v585
        %1241 = vmatpush2.msra.mxu0 %v584
        %1242 = vmatprep.subr.mxu0 %v579
        %1243 = vmatpush2.msra.mxu0 %v578
        %1244 = vmatprep.mubr.f32.mxu0 %v285
        %1245 = vmatmul.mubr.f32.gmra.mxu0 %v284
        %v1246 = vpop.f32.mrf.mxu0
        %v1247 = vadd.f32 %v1176, %v1246
        %v1248 = vpop.f32.mrf.mxu0
        %v1249 = vadd.f32 %v1178, %v1248
        %1250 = vdwg.mxu0
        %1251 = vmatprep.subr.mxu0 %v765
        %1252 = vmatpush1.msra.mxu0 %v764
        %1253 = vmatprep.subr.mxu0 %v759
        %1254 = vmatpush1.msra.mxu0 %v758
        %1255 = vmatprep.subr.mxu0 %v753
        %1256 = vmatpush1.msra.mxu0 %v752
        %1257 = vmatprep.subr.mxu0 %v747
        %1258 = vmatpush1.msra.mxu0 %v746
        %1259 = vmatprep.subr.mxu0 %v741
        %1260 = vmatpush1.msra.mxu0 %v740
        %1261 = vmatprep.subr.mxu0 %v735
        %1262 = vmatpush1.msra.mxu0 %v734
        %1263 = vmatprep.subr.mxu0 %v729
        %1264 = vmatpush1.msra.mxu0 %v728
        %1265 = vmatprep.subr.mxu0 %v723
        %1266 = vmatpush1.msra.mxu0 %v722
        %1267 = vmatprep.subr.mxu0 %v717
        %1268 = vmatpush1.msra.mxu0 %v716
        %1269 = vmatprep.subr.mxu0 %v711
        %1270 = vmatpush1.msra.mxu0 %v710
        %1271 = vmatprep.subr.mxu0 %v705
        %1272 = vmatpush1.msra.mxu0 %v704
        %1273 = vmatprep.subr.mxu0 %v699
        %1274 = vmatpush1.msra.mxu0 %v698
        %1275 = vmatprep.subr.mxu0 %v693
        %1276 = vmatpush1.msra.mxu0 %v692
        %1277 = vmatprep.subr.mxu0 %v687
        %1278 = vmatpush1.msra.mxu0 %v686
        %1279 = vmatprep.subr.mxu0 %v681
        %1280 = vmatpush1.msra.mxu0 %v680
        %1281 = vmatprep.subr.mxu0 %v675
        %1282 = vmatpush1.msra.mxu0 %v674
        %1283 = vmatprep.subr.mxu0 %v861
        %1284 = vmatpush2.msra.mxu0 %v860
        %1285 = vmatprep.subr.mxu0 %v855
        %1286 = vmatpush2.msra.mxu0 %v854
        %1287 = vmatprep.subr.mxu0 %v849
        %1288 = vmatpush2.msra.mxu0 %v848
        %1289 = vmatprep.subr.mxu0 %v843
        %1290 = vmatpush2.msra.mxu0 %v842
        %1291 = vmatprep.subr.mxu0 %v837
        %1292 = vmatpush2.msra.mxu0 %v836
        %1293 = vmatprep.subr.mxu0 %v831
        %1294 = vmatpush2.msra.mxu0 %v830
        %1295 = vmatprep.subr.mxu0 %v825
        %1296 = vmatpush2.msra.mxu0 %v824
        %1297 = vmatprep.subr.mxu0 %v819
        %1298 = vmatpush2.msra.mxu0 %v818
        %1299 = vmatprep.subr.mxu0 %v813
        %1300 = vmatpush2.msra.mxu0 %v812
        %1301 = vmatprep.subr.mxu0 %v807
        %1302 = vmatpush2.msra.mxu0 %v806
        %1303 = vmatprep.subr.mxu0 %v801
        %1304 = vmatpush2.msra.mxu0 %v800
        %1305 = vmatprep.subr.mxu0 %v795
        %1306 = vmatpush2.msra.mxu0 %v794
        %1307 = vmatprep.subr.mxu0 %v789
        %1308 = vmatpush2.msra.mxu0 %v788
        %1309 = vmatprep.subr.mxu0 %v783
        %1310 = vmatpush2.msra.mxu0 %v782
        %1311 = vmatprep.subr.mxu0 %v777
        %1312 = vmatpush2.msra.mxu0 %v776
        %1313 = vmatprep.subr.mxu0 %v771
        %1314 = vmatpush2.msra.mxu0 %v770
        %1315 = vmatprep.mubr.f32.mxu0 %v287
        %1316 = vmatmul.mubr.f32.gmra.mxu0 %v286
        %v1317 = vpop.f32.mrf.mxu0
        %v1318 = vadd.f32 %v1247, %v1317
        %v1319 = vpop.f32.mrf.mxu0
        %v1320 = vadd.f32 %v1249, %v1319
        %1321 = vdwg.mxu0
        %1322 = vmatprep.subr.mxu0 %v383
        %1323 = vmatpush1.msra.mxu0 %v382
        %1324 = vmatprep.subr.mxu0 %v377
        %1325 = vmatpush1.msra.mxu0 %v376
        %1326 = vmatprep.subr.mxu0 %v371
        %1327 = vmatpush1.msra.mxu0 %v370
        %1328 = vmatprep.subr.mxu0 %v365
        %1329 = vmatpush1.msra.mxu0 %v364
        %1330 = vmatprep.subr.mxu0 %v359
        %1331 = vmatpush1.msra.mxu0 %v358
        %1332 = vmatprep.subr.mxu0 %v353
        %1333 = vmatpush1.msra.mxu0 %v352
        %1334 = vmatprep.subr.mxu0 %v347
        %1335 = vmatpush1.msra.mxu0 %v346
        %1336 = vmatprep.subr.mxu0 %v341
        %1337 = vmatpush1.msra.mxu0 %v340
        %1338 = vmatprep.subr.mxu0 %v335
        %1339 = vmatpush1.msra.mxu0 %v334
        %1340 = vmatprep.subr.mxu0 %v329
        %1341 = vmatpush1.msra.mxu0 %v328
        %1342 = vmatprep.subr.mxu0 %v323
        %1343 = vmatpush1.msra.mxu0 %v322
        %1344 = vmatprep.subr.mxu0 %v317
        %1345 = vmatpush1.msra.mxu0 %v316
        %1346 = vmatprep.subr.mxu0 %v311
        %1347 = vmatpush1.msra.mxu0 %v310
        %1348 = vmatprep.subr.mxu0 %v305
        %1349 = vmatpush1.msra.mxu0 %v304
        %1350 = vmatprep.subr.mxu0 %v299
        %1351 = vmatpush1.msra.mxu0 %v298
        %1352 = vmatprep.subr.mxu0 %v293
        %1353 = vmatpush1.msra.mxu0 %v292
        %1354 = vmatprep.subr.mxu0 %v479
        %1355 = vmatpush2.msra.mxu0 %v478
        %1356 = vmatprep.subr.mxu0 %v473
        %1357 = vmatpush2.msra.mxu0 %v472
        %1358 = vmatprep.subr.mxu0 %v467
        %1359 = vmatpush2.msra.mxu0 %v466
        %1360 = vmatprep.subr.mxu0 %v461
        %1361 = vmatpush2.msra.mxu0 %v460
        %1362 = vmatprep.subr.mxu0 %v455
        %1363 = vmatpush2.msra.mxu0 %v454
        %1364 = vmatprep.subr.mxu0 %v449
        %1365 = vmatpush2.msra.mxu0 %v448
        %1366 = vmatprep.subr.mxu0 %v443
        %1367 = vmatpush2.msra.mxu0 %v442
        %1368 = vmatprep.subr.mxu0 %v437
        %1369 = vmatpush2.msra.mxu0 %v436
        %1370 = vmatprep.subr.mxu0 %v431
        %1371 = vmatpush2.msra.mxu0 %v430
        %1372 = vmatprep.subr.mxu0 %v425
        %1373 = vmatpush2.msra.mxu0 %v424
        %1374 = vmatprep.subr.mxu0 %v419
        %1375 = vmatpush2.msra.mxu0 %v418
        %1376 = vmatprep.subr.mxu0 %v413
        %1377 = vmatpush2.msra.mxu0 %v412
        %1378 = vmatprep.subr.mxu0 %v407
        %1379 = vmatpush2.msra.mxu0 %v406
        %1380 = vmatprep.subr.mxu0 %v401
        %1381 = vmatpush2.msra.mxu0 %v400
        %1382 = vmatprep.subr.mxu0 %v395
        %1383 = vmatpush2.msra.mxu0 %v394
        %1384 = vmatprep.subr.mxu0 %v389
        %1385 = vmatpush2.msra.mxu0 %v388
        %1386 = vmatprep.mubr.f32.mxu0 %v283
        %1387 = vmatmul.mubr.f32.gmra.mxu0 %v282
        %v1388 = vpop.f32.mrf.mxu0
        %v1389 = vadd.f32 %v885, %v1388
        %v1390 = vpop.f32.mrf.mxu0
        %v1391 = vadd.f32 %v889, %v1390
        %1392 = vdwg.mxu0
        %1393 = vmatprep.subr.mxu0 %v575
        %1394 = vmatpush1.msra.mxu0 %v574
        %1395 = vmatprep.subr.mxu0 %v569
        %1396 = vmatpush1.msra.mxu0 %v568
        %1397 = vmatprep.subr.mxu0 %v563
        %1398 = vmatpush1.msra.mxu0 %v562
        %1399 = vmatprep.subr.mxu0 %v557
        %1400 = vmatpush1.msra.mxu0 %v556
        %1401 = vmatprep.subr.mxu0 %v551
        %1402 = vmatpush1.msra.mxu0 %v550
        %1403 = vmatprep.subr.mxu0 %v545
        %1404 = vmatpush1.msra.mxu0 %v544
        %1405 = vmatprep.subr.mxu0 %v539
        %1406 = vmatpush1.msra.mxu0 %v538
        %1407 = vmatprep.subr.mxu0 %v533
        %1408 = vmatpush1.msra.mxu0 %v532
        %1409 = vmatprep.subr.mxu0 %v527
        %1410 = vmatpush1.msra.mxu0 %v526
        %1411 = vmatprep.subr.mxu0 %v521
        %1412 = vmatpush1.msra.mxu0 %v520
        %1413 = vmatprep.subr.mxu0 %v515
        %1414 = vmatpush1.msra.mxu0 %v514
        %1415 = vmatprep.subr.mxu0 %v509
        %1416 = vmatpush1.msra.mxu0 %v508
        %1417 = vmatprep.subr.mxu0 %v503
        %1418 = vmatpush1.msra.mxu0 %v502
        %1419 = vmatprep.subr.mxu0 %v497
        %1420 = vmatpush1.msra.mxu0 %v496
        %1421 = vmatprep.subr.mxu0 %v491
        %1422 = vmatpush1.msra.mxu0 %v490
        %1423 = vmatprep.subr.mxu0 %v485
        %1424 = vmatpush1.msra.mxu0 %v484
        %1425 = vmatprep.subr.mxu0 %v671
        %1426 = vmatpush2.msra.mxu0 %v670
        %1427 = vmatprep.subr.mxu0 %v665
        %1428 = vmatpush2.msra.mxu0 %v664
        %1429 = vmatprep.subr.mxu0 %v659
        %1430 = vmatpush2.msra.mxu0 %v658
        %1431 = vmatprep.subr.mxu0 %v653
        %1432 = vmatpush2.msra.mxu0 %v652
        %1433 = vmatprep.subr.mxu0 %v647
        %1434 = vmatpush2.msra.mxu0 %v646
        %1435 = vmatprep.subr.mxu0 %v641
        %1436 = vmatpush2.msra.mxu0 %v640
        %1437 = vmatprep.subr.mxu0 %v635
        %1438 = vmatpush2.msra.mxu0 %v634
        %1439 = vmatprep.subr.mxu0 %v629
        %1440 = vmatpush2.msra.mxu0 %v628
        %1441 = vmatprep.subr.mxu0 %v623
        %1442 = vmatpush2.msra.mxu0 %v622
        %1443 = vmatprep.subr.mxu0 %v617
        %1444 = vmatpush2.msra.mxu0 %v616
        %1445 = vmatprep.subr.mxu0 %v611
        %1446 = vmatpush2.msra.mxu0 %v610
        %1447 = vmatprep.subr.mxu0 %v605
        %1448 = vmatpush2.msra.mxu0 %v604
        %1449 = vmatprep.subr.mxu0 %v599
        %1450 = vmatpush2.msra.mxu0 %v598
        %1451 = vmatprep.subr.mxu0 %v593
        %1452 = vmatpush2.msra.mxu0 %v592
        %1453 = vmatprep.subr.mxu0 %v587
        %1454 = vmatpush2.msra.mxu0 %v586
        %1455 = vmatprep.subr.mxu0 %v581
        %1456 = vmatpush2.msra.mxu0 %v580
        %1457 = vmatprep.mubr.f32.mxu0 %v285
        %1458 = vmatmul.mubr.f32.gmra.mxu0 %v284
        %v1459 = vpop.f32.mrf.mxu0
        %v1460 = vadd.f32 %v1389, %v1459
        %v1461 = vpop.f32.mrf.mxu0
        %v1462 = vadd.f32 %v1391, %v1461
        %1463 = vdwg.mxu0
        %1464 = vmatprep.subr.mxu0 %v767
        %1465 = vmatpush1.msra.mxu0 %v766
        %1466 = vmatprep.subr.mxu0 %v761
        %1467 = vmatpush1.msra.mxu0 %v760
        %1468 = vmatprep.subr.mxu0 %v755
        %1469 = vmatpush1.msra.mxu0 %v754
        %1470 = vmatprep.subr.mxu0 %v749
        %1471 = vmatpush1.msra.mxu0 %v748
        %1472 = vmatprep.subr.mxu0 %v743
        %1473 = vmatpush1.msra.mxu0 %v742
        %1474 = vmatprep.subr.mxu0 %v737
        %1475 = vmatpush1.msra.mxu0 %v736
        %1476 = vmatprep.subr.mxu0 %v731
        %1477 = vmatpush1.msra.mxu0 %v730
        %1478 = vmatprep.subr.mxu0 %v725
        %1479 = vmatpush1.msra.mxu0 %v724
        %1480 = vmatprep.subr.mxu0 %v719
        %1481 = vmatpush1.msra.mxu0 %v718
        %1482 = vmatprep.subr.mxu0 %v713
        %1483 = vmatpush1.msra.mxu0 %v712
        %1484 = vmatprep.subr.mxu0 %v707
        %1485 = vmatpush1.msra.mxu0 %v706
        %1486 = vmatprep.subr.mxu0 %v701
        %1487 = vmatpush1.msra.mxu0 %v700
        %1488 = vmatprep.subr.mxu0 %v695
        %1489 = vmatpush1.msra.mxu0 %v694
        %1490 = vmatprep.subr.mxu0 %v689
        %1491 = vmatpush1.msra.mxu0 %v688
        %1492 = vmatprep.subr.mxu0 %v683
        %1493 = vmatpush1.msra.mxu0 %v682
        %1494 = vmatprep.subr.mxu0 %v677
        %1495 = vmatpush1.msra.mxu0 %v676
        %1496 = vmatprep.subr.mxu0 %v863
        %1497 = vmatpush2.msra.mxu0 %v862
        %1498 = vmatprep.subr.mxu0 %v857
        %1499 = vmatpush2.msra.mxu0 %v856
        %1500 = vmatprep.subr.mxu0 %v851
        %1501 = vmatpush2.msra.mxu0 %v850
        %1502 = vmatprep.subr.mxu0 %v845
        %1503 = vmatpush2.msra.mxu0 %v844
        %1504 = vmatprep.subr.mxu0 %v839
        %1505 = vmatpush2.msra.mxu0 %v838
        %1506 = vmatprep.subr.mxu0 %v833
        %1507 = vmatpush2.msra.mxu0 %v832
        %1508 = vmatprep.subr.mxu0 %v827
        %1509 = vmatpush2.msra.mxu0 %v826
        %1510 = vmatprep.subr.mxu0 %v821
        %1511 = vmatpush2.msra.mxu0 %v820
        %1512 = vmatprep.subr.mxu0 %v815
        %1513 = vmatpush2.msra.mxu0 %v814
        %1514 = vmatprep.subr.mxu0 %v809
        %1515 = vmatpush2.msra.mxu0 %v808
        %1516 = vmatprep.subr.mxu0 %v803
        %1517 = vmatpush2.msra.mxu0 %v802
        %1518 = vmatprep.subr.mxu0 %v797
        %1519 = vmatpush2.msra.mxu0 %v796
        %1520 = vmatprep.subr.mxu0 %v791
        %1521 = vmatpush2.msra.mxu0 %v790
        %1522 = vmatprep.subr.mxu0 %v785
        %1523 = vmatpush2.msra.mxu0 %v784
        %1524 = vmatprep.subr.mxu0 %v779
        %1525 = vmatpush2.msra.mxu0 %v778
        %1526 = vmatprep.subr.mxu0 %v773
        %1527 = vmatpush2.msra.mxu0 %v772
        %1528 = vmatprep.mubr.f32.mxu0 %v287
        %1529 = vmatmul.mubr.f32.gmra.mxu0 %v286
        %v1530 = vpop.f32.mrf.mxu0
        %v1531 = vadd.f32 %v1460, %v1530
        %v1532 = vpop.f32.mrf.mxu0
        %v1533 = vadd.f32 %v1462, %v1532
        %1534 = vdwg.mxu0
        %v1535 = vtanh.pop %v1105
        %v1536 = vtanh.pop %v1107
        %v1537 = vtanh.pop %v1318
        %v1538 = vtanh.pop %v1320
        %v1539 = vtanh.pop %v1531
        %v1540 = vtanh.pop %v1533
        %v1541 = vld [vmem:[#allocation8] sm:$0x3f]
        %v1543 = vlaneseq
        %v1544 = vshrl.u32 %v1543, 7
        %v1545 = vsub.s32 0, %v1544
        %v1546 = vrot.slane %v1541, %v1545
        %v1547 = vlaneseq
        %v1548 = vshrl.u32 %v1547, 7
        %v1549 = vsub.s32 1, %v1548
        %v1550 = vrot.slane %v1541, %v1549
        %v1551 = vlaneseq
        %v1552 = vshrl.u32 %v1551, 7
        %v1553 = vsub.s32 2, %v1552
        %v1554 = vrot.slane %v1541, %v1553
        %v1555 = vlaneseq
        %v1556 = vshrl.u32 %v1555, 7
        %v1557 = vsub.s32 3, %v1556
        %v1558 = vrot.slane %v1541, %v1557
        %v1559 = vlaneseq
        %v1560 = vshrl.u32 %v1559, 7
        %v1561 = vsub.s32 4, %v1560
        %v1562 = vrot.slane %v1541, %v1561
        %v1563 = vlaneseq
        %v1564 = vshrl.u32 %v1563, 7
        %v1565 = vsub.s32 5, %v1564
        %v1566 = vrot.slane %v1541, %v1565
        %v1573 = vmul.f32 %v1535, %v1546
        %v1574 = vmul.f32 %v1536, %v1550
        %v1575 = vmul.f32 %v1537, %v1554
        %v1576 = vmul.f32 %v1538, %v1558
        %v1577 = vmul.f32 %v1539, %v1562
        %v1578 = vmul.f32 %v1540, %v1566
        %v1579 = vadd.f32 %v1573, %v1574
        %v1580 = vadd.f32 %v1579, %v1575
        %v1581 = vadd.f32 %v1580, %v1576
        %v1582 = vadd.f32 %v1581, %v1577
        %v1583 = vadd.f32 %v1582, %v1578
        %1584 = vadd.xlane.f32.xlu0 %v1583
        %v1585 = vpop.xlane.xlu0 %1584
        %s1586 = sld [smem:[#allocation2]]
        %v1587 = vstv %s1586
        %v1588 = vadd.f32 %v1585, %v1587
        %vm1589 = vcmask 7168
        %1590 = vst.msk [vmem:[%s281] sm:$0xff] %vm1589, %v1588
        %p1591 = scmp.lt.s32.totalorder %s22, 2
        %s1592 = scalar_select %p1591, %s22, 2
        %s1593 = smul.addr %s1592, 8
        %s1594 = scalar_lea.vmem %s5, %s1593
        // Predicated region
        $region57: #{tpu_custom_call.1} parent=39 // pred_check
          %p1595 = pneg %p150
        $region58: #{tpu_custom_call.1} parent=39 // pred_check_branch
          %1597 = sbr.rel (%p1595) target = $region60
        $region59: #{tpu_custom_call.1} parent=39 // pred_region
          _
        $region60: #{tpu_custom_call.1} parent=39 // pred_fallthru
          _
      $region40: #{tpu_custom_call.1} parent=5 // pred_fallthru
        _
      %p1598 = scmp.le.s32.totalorder 2, %s17
      // Predicated region
      $region61: #{tpu_custom_call.1} parent=5 // pred_check
        %p1599 = pneg %p1598
      $region62: #{tpu_custom_call.1} parent=5 // pred_check_branch
        %1601 = sbr.rel (%p1599) target = $region64
      $region63: #{tpu_custom_call.1} parent=5 // pred_region
        %s1602 = ssub.s32 %s17, 2
        // Predicated region
        $region65: #{tpu_custom_call.1} parent=63 // pred_check
          %p1603 = pneg %p156
        $region66: #{tpu_custom_call.1} parent=63 // pred_check_branch
          %1605 = sbr.rel (%p1603) target = $region68
        $region67: #{tpu_custom_call.1} parent=63 // pred_region
          %p1606 = scmp.lt.s32.totalorder %s23, 2
          %s1607 = scalar_select %p1606, %s23, 2
          %s1608 = smul.addr %s1607, 8
          %s1609 = scalar_lea.vmem %s5, %s1608
        $region68: #{tpu_custom_call.1} parent=63 // pred_fallthru
          _
      $region64: #{tpu_custom_call.1} parent=5 // pred_fallthru
        _
    $region6: #{tpu_custom_call.1} parent=1 // loop_footer
      %s21 = sadd.s32 1, %s17
    $region7: #{tpu_custom_call.1} parent=1 // loop_footer_branch
      %16 = sbr.rel target = $region3
    $region8: #{tpu_custom_call.1} parent=1 // loop_exit
      _
    %1610 = vsyncpa [#allocation4], 1
    %s1611 = scalar_lea.sflag [#allocation4], 1
    %1612 = vsyncpa %s1611, 1
    %1613 = vsyncpa [#allocation6], 1
    %1614 = vsyncpa [#allocation9], 1

</llo_original>
